<compile_context>
chip_gen: v7x
topology: tpu7x:2x2x1
jax: 0.10.0
libtpu: 0.0.40
codegen_flags: <defaults>
</compile_context>

<pallas_src>
import jax
import jax.numpy as jnp
from jax.experimental import pallas as pl
from jax.experimental.pallas import tpu as pltpu


# ----------------------------------------------------------------------------
# helpers
# ----------------------------------------------------------------------------
def _cdiv(a, b):
    return -(-a // b)


def _round_up(x, m):
    return ((x + m - 1) // m) * m


def _vmem_info():
    """(physical capacity, conservative budget) in bytes."""
    try:
        cap = int(pltpu.get_tpu_info().vmem_capacity_bytes)
    except Exception:
        cap = 64 * 1024 * 1024  # conservative (v7x-sized) fallback
    budget = int(min(cap // 2, 48 * 1024 * 1024))
    return cap, budget


def _fits_vmem(c_in, c4):
    """Resident weight/bias (double-buffered) + a 512-lane x/y tile must fit."""
    cap, _ = _vmem_info()
    static = 2 * (c4 * c_in + c4) * 4          # f32 worst case
    floor_tiles = 2 * 512 * (c_in + c4) * 4    # double-buffered x + y at the floor
    return static + floor_tiles <= int(0.8 * cap)


# ----------------------------------------------------------------------------
# Pallas kernel: one spatial tile of   W^T (4*C_out, C_in) @ X (C_in, s_tile)
# ----------------------------------------------------------------------------
def _deconv_cm_kernel(x_ref, w_ref, b_ref, o_ref):
    # f32 path: full MXU precision (parity with the Precision.HIGHEST reference).
    prec = (jax.lax.Precision.HIGHEST if w_ref.dtype == jnp.float32
            else jax.lax.Precision.DEFAULT)
    x = x_ref[0].astype(w_ref.dtype)           # in-kernel compute-dtype cast
    acc = jnp.dot(w_ref[...], x,
                  preferred_element_type=jnp.float32, precision=prec)
    o_ref[0] = (acc + b_ref[...]).astype(o_ref.dtype)


def deconv_channel_major(x_cm, w_t, b_col, *, out_dtype, tile_lanes_cap=32768):
    """x_cm: (N, C_in, S); w_t: (4*C_out, C_in); b_col: (4*C_out, 1) f32.

    Returns y_cm (N, 4*C_out, S) in out_dtype, channel order (oc, kh, kw).
    """
    N, C_in, S = x_cm.shape
    C4 = w_t.shape[0]

    xb = jnp.dtype(x_cm.dtype).itemsize
    ob = jnp.dtype(out_dtype).itemsize
    wb = jnp.dtype(w_t.dtype).itemsize

    cap, budget = _vmem_info()
    # Weight + bias are double-buffered by the pipeline even with a constant
    # index_map; the x / y tiles are double-buffered as well.
    static_bytes = 2 * (C4 * C_in * wb + C4 * 4)
    per_lane = 2 * (C_in * xb + C4 * ob)

    s_max = max(512, ((budget - static_bytes) // max(per_lane, 1)) // 128 * 128)
    s_max = min(s_max, int(tile_lanes_cap))

    if S <= s_max:
        s_tile, g = S, 1                       # full extent: always a legal block
        if N == 1 and S >= 1024:
            # keep >=2 grid steps so a 2-TensorCore part (v7x) can split work
            g = 2
            s_tile = _round_up(_cdiv(S, g), 128)
            g = _cdiv(S, s_tile)
    else:
        # size the tile from the grid count -> at most one small ragged tail
        g = _cdiv(S, s_max)
        s_tile = _round_up(_cdiv(S, g), 128)
        g = _cdiv(S, s_tile)                   # tail block handled by masking

    needed = static_bytes + per_lane * s_tile + (2 << 20)
    vmem_limit = int(min(int(cap * 0.9), max(budget, needed)))

    return pl.pallas_call(
        _deconv_cm_kernel,
        out_shape=jax.ShapeDtypeStruct((N, C4, S), out_dtype),
        grid=(N, g),
        in_specs=[
            pl.BlockSpec((1, C_in, s_tile), lambda n, j: (n, 0, j)),
            pl.BlockSpec((C4, C_in), lambda n, j: (0, 0)),
            pl.BlockSpec((C4, 1), lambda n, j: (0, 0)),
        ],
        out_specs=pl.BlockSpec((1, C4, s_tile), lambda n, j: (n, 0, j)),
        compiler_params=pltpu.CompilerParams(
            dimension_semantics=("parallel", "parallel"),
            vmem_limit_bytes=vmem_limit,
        ),
    )(x_cm, w_t, b_col)


# ----------------------------------------------------------------------------
# Pure-JAX deconv (tiny / sub-lane-dense problems and reference)
# ----------------------------------------------------------------------------
def _deconv_einsum(x_nchw, weight, bias):
    y = jnp.einsum(
        "nihw,iokl->nohkwl", x_nchw, weight, precision=jax.lax.Precision.HIGHEST
    )
    n, o, h, kh, w, kw = y.shape
    return y.reshape(n, o, h * kh, w * kw) + bias[None, :, None, None]


class UpCatPallas:
    """JAX/Pallas equivalent of the PyTorch UpCat module (is_deconv=True)."""

    _MIN_LANES = 128     # spatial tile is the output lane dim
    _MIN_SUBLANES = 8    # 4*C_out is the output sublane dim
    _MIN_WORK = 256      # below this, pallas_call launch overhead dominates

    def __init__(self, in_feat, out_feat, key, compute_dtype=None):
        self.in_feat = in_feat
        self.out_feat = out_feat
        self.compute_dtype = compute_dtype     # e.g. jnp.bfloat16 MXU operands
        k_w, k_b = jax.random.split(key)
        # ConvTranspose2d weight: (in_feat, out_feat, 2, 2), bias: (out_feat,)
        fan_in = in_feat * 2 * 2
        bound = 1.0 / (fan_in ** 0.5)
        self.weight = jax.random.uniform(
            k_w, (in_feat, out_feat, 2, 2), jnp.float32, -bound, bound
        )
        self.bias = jax.random.uniform(
            k_b, (out_feat,), jnp.float32, -bound, bound
        )

    def __call__(self, inputs, down_outputs, rand_key, tile_lanes_cap=32768):
        N, C_in, H, W = down_outputs.shape
        C_out = self.out_feat
        C4 = 4 * C_out
        S = H * W

        use_kernel = (
            S >= self._MIN_LANES
            and C4 >= self._MIN_SUBLANES
            and N * S >= self._MIN_WORK
            and _fits_vmem(C_in, C4)
        )

        if use_kernel:
            # ---- hot path: channel-major Pallas GEMM, no input transpose ----
            x_cm = down_outputs.reshape(N, C_in, S)      # free (contiguous) reshape
            # rows ordered (oc, kh, kw)
            w_t = jnp.transpose(self.weight, (1, 2, 3, 0)).reshape(C4, C_in)
            if self.compute_dtype is not None:
                w_t = w_t.astype(self.compute_dtype)     # tiny; x cast in-kernel
            b_col = jnp.repeat(self.bias, 4).reshape(C4, 1).astype(jnp.float32)

            y_cm = deconv_channel_major(
                x_cm, w_t, b_col,
                out_dtype=inputs.dtype, tile_lanes_cap=tile_lanes_cap,
            )

            # 2x2 pixel-shuffle back to NCHW (one XLA pass; XLA fuses it with
            # the concat below).  TODO(synk): fuse this + concat into the kernel
            # (review items 1/3) once the in-VMEM (kh,kw) interleave is proven.
            y = y_cm.reshape(N, C_out, 2, 2, H, W)
            y = jnp.transpose(y, (0, 1, 4, 2, 5, 3)).reshape(N, C_out, 2 * H, 2 * W)
        else:
            # ---- tiny / sub-lane-dense / VMEM-overflow path ----
            y = _deconv_einsum(down_outputs, self.weight, self.bias)
            y = y.astype(inputs.dtype)

        # ---- width-offset padding branch (rare path; plain JAX glue) ----
        offset = inputs.shape[3] - y.shape[3]
        if offset >= 1:
            addition = jax.random.uniform(
                rand_key,
                (y.shape[0], y.shape[1], y.shape[2], offset),
                dtype=y.dtype,
            )
            y = jnp.concatenate([y, addition], axis=3)

        # ---- channel concat (PyTorch NCHW contract) ----
        return jnp.concatenate([inputs, y], axis=1)


def _reference_upcat(module, inputs, down_outputs):
    """Pure-JAX reference for the deconv path (offset == 0 case)."""
    y = _deconv_einsum(down_outputs, module.weight, module.bias)
    return jnp.concatenate([inputs, y], axis=1)


if __name__ == "__main__":
    key = jax.random.PRNGKey(0)
    k_param, k_x, k_skip, k_rand = jax.random.split(key, 4)

    # --- main case: Pallas kernel path (4*C_out = 128 sublanes, S = 256 lanes) ---
    in_feat, out_feat = 64, 32
    N, H, W = 2, 16, 16
    down_outputs = jax.random.normal(k_x, (N, in_feat, H, W), jnp.float32)
    inputs = jax.random.normal(k_skip, (N, out_feat, 2 * H, 2 * W), jnp.float32)

    module = UpCatPallas(in_feat, out_feat, k_param)
    out = jax.block_until_ready(module(inputs, down_outputs, k_rand))
    ref = _reference_upcat(module, inputs, down_outputs)
    assert out.shape == (N, 2 * out_feat, 2 * H, 2 * W), out.shape
    assert jnp.allclose(out, ref, atol=1e-4, rtol=1e-4), "mismatch vs reference"

    # --- same kernel with bf16 MXU operands (cast fused in-kernel, f32 acc) ---
    module_bf16 = UpCatPallas(in_feat, out_feat, k_param, compute_dtype=jnp.bfloat16)
    out_bf16 = jax.block_until_ready(module_bf16(inputs, down_outputs, k_rand))
    assert out_bf16.shape == out.shape
    assert jnp.allclose(out_bf16, ref, atol=5e-2, rtol=5e-2), "bf16 path mismatch"

    # --- multi-tile grid with a ragged (boundary-masked) spatial tail ---
    mod_mt = UpCatPallas(32, 32, k_param)
    dn_mt = jax.random.normal(k_x, (1, 32, 10, 40), jnp.float32)      # S = 400
    skip_mt = jax.random.normal(k_skip, (1, 32, 20, 80), jnp.float32)
    out_mt = jax.block_until_ready(
        mod_mt(skip_mt, dn_mt, k_rand, tile_lanes_cap=256))           # 2 tiles of 256
    ref_mt = _reference_upcat(mod_mt, skip_mt, dn_mt)
    assert out_mt.shape == (1, 64, 20, 80), out_mt.shape
    assert jnp.allclose(out_mt, ref_mt, atol=1e-4, rtol=1e-4), "multi-tile mismatch"

    # --- tiny shapes + width-offset branch (XLA fallback path, odd sizes) ---
    small = UpCatPallas(8, 4, k_param)
    dn_s = jax.random.normal(k_x, (1, 8, 5, 5), jnp.float32)
    skip_s = jax.random.normal(k_skip, (1, 4, 10, 13), jnp.float32)   # offset = 3
    out_s = jax.block_until_ready(small(skip_s, dn_s, k_rand))
    assert out_s.shape == (1, 8, 10, 13), out_s.shape
    ref_s = _deconv_einsum(dn_s, small.weight, small.bias)
    assert jnp.allclose(out_s[:, :4], skip_s)
    assert jnp.allclose(out_s[:, 4:, :, :10], ref_s, atol=1e-4, rtol=1e-4)

    print("KERNEL_OK")
</pallas_src>

<mosaic_0001>
module attributes {stable_mosaic.version = 11 : i64} {
  func.func @_deconv_cm_kernel(%arg0: i32, %arg1: i32, %arg2: memref<1x64x256xf32, #tpu.memory_space<vmem>>, %arg3: memref<128x64xf32, #tpu.memory_space<vmem>>, %arg4: memref<128x1xf32, #tpu.memory_space<vmem>>, %arg5: memref<1x128x256xf32, #tpu.memory_space<vmem>>) attributes {dimension_semantics = [#tpu.dimension_semantics<parallel>, #tpu.dimension_semantics<parallel>], iteration_bounds = array<i64: 2, 1>, scalar_prefetch = 0 : i64, scratch_operands = 0 : i64, tpu.core_type = #tpu.core_type<tc>, window_params = [{transform_indices = @transform_0, window_bounds = array<i64: 1, 64, 256>}, {pipeline_mode = #tpu.pipeline_mode<synchronous>, transform_indices = @transform_1, window_bounds = array<i64: 128, 64>}, {pipeline_mode = #tpu.pipeline_mode<synchronous>, transform_indices = @transform_2, window_bounds = array<i64: 128, 1>}, {transform_indices = @transform_3, window_bounds = array<i64: 1, 128, 256>}]} {
    %c0 = arith.constant 0 : index
    %c0_0 = arith.constant 0 : index
    %c0_1 = arith.constant 0 : index
    %0 = vector.load %arg2[%c0, %c0_0, %c0_1] : memref<1x64x256xf32, #tpu.memory_space<vmem>>, vector<1x64x256xf32>
    %1 = vector.shape_cast %0 : vector<1x64x256xf32> to vector<64x256xf32>
    %c0_2 = arith.constant 0 : index
    %c0_3 = arith.constant 0 : index
    %2 = vector.load %arg3[%c0_2, %c0_3] : memref<128x64xf32, #tpu.memory_space<vmem>>, vector<128x64xf32>
    %cst = arith.constant dense<0.000000e+00> : vector<128x256xf32>
    %3 = tpu.matmul %2, %1, %cst {dimension_numbers = #tpu.dot_dimension_numbers<[1], [0], [0], [1], [0, 0, 1, 1], [], []>, precision = #tpu.contract_precision<fp32>} : vector<128x64xf32>, vector<64x256xf32>, vector<128x256xf32> -> vector<128x256xf32>
    %c0_4 = arith.constant 0 : index
    %c0_5 = arith.constant 0 : index
    %4 = vector.load %arg4[%c0_4, %c0_5] : memref<128x1xf32, #tpu.memory_space<vmem>>, vector<128x1xf32>
    %5 = vector.broadcast %4 : vector<128x1xf32> to vector<128x256xf32>
    %6 = arith.addf %3, %5 : vector<128x256xf32>
    %c0_6 = arith.constant 0 : index
    %c0_7 = arith.constant 0 : index
    %c0_8 = arith.constant 0 : index
    %7 = vector.load %arg5[%c0_6, %c0_7, %c0_8] : memref<1x128x256xf32, #tpu.memory_space<vmem>>, vector<1x128x256xf32>
    %8 = vector.shape_cast %7 : vector<1x128x256xf32> to vector<128x256xf32>
    %9 = vector.shape_cast %6 : vector<128x256xf32> to vector<1x128x256xf32>
    tpu.vector_store %arg5[%c0_6, %c0_7, %c0_8], %9 {strides = array<i32>} : memref<1x128x256xf32, #tpu.memory_space<vmem>>, vector<1x128x256xf32>,
    return
  }
  func.func @transform_0(%arg0: i32, %arg1: i32) -> (i32, i32, i32) {
    %c0_i32 = arith.constant 0 : i32
    %c0_i32_0 = arith.constant 0 : i32
    return %arg0, %c0_i32, %arg1 : i32, i32, i32
  }
  func.func @transform_1(%arg0: i32, %arg1: i32) -> (i32, i32) {
    %c0_i32 = arith.constant 0 : i32
    %c0_i32_0 = arith.constant 0 : i32
    %c0_i32_1 = arith.constant 0 : i32
    return %c0_i32, %c0_i32_0 : i32, i32
  }
  func.func @transform_2(%arg0: i32, %arg1: i32) -> (i32, i32) {
    %c0_i32 = arith.constant 0 : i32
    %c0_i32_0 = arith.constant 0 : i32
    %c0_i32_1 = arith.constant 0 : i32
    return %c0_i32, %c0_i32_0 : i32, i32
  }
  func.func @transform_3(%arg0: i32, %arg1: i32) -> (i32, i32, i32) {
    %c0_i32 = arith.constant 0 : i32
    %c0_i32_0 = arith.constant 0 : i32
    return %arg0, %c0_i32, %arg1 : i32, i32, i32
  }
}

</mosaic_0001>

<llo_original>
// kernel: tpu_custom_call.1
$region0: #{tpu_custom_call.1}
  #allocation0 [shape = 'u32[]', space=smem, size = 0x4, offset = 0x4, fixed_abs, tag = 'smem constant byte address 0x4 - core index']
  #allocation1 [shape = 'u32[144,128]{1,0:T(1,128)}', space=vmem, size = 0x12000, scoped, tag = 'internal scratch']
  %s0 = inlined_call_operand.vmem [shape: f32[2,64,256], index: 0, kind: input, shape index: {}]
  %s1 = inlined_call_operand.vmem [shape: f32[128,64], index: 1, kind: input, shape index: {}]
  %s2 = inlined_call_operand.vmem [shape: f32[128,1], index: 2, kind: input, shape index: {}]
  %s3 = inlined_call_operand.hbm [shape: f32[2,128,256], index: 3, kind: output, shape index: {}]
  %s4 = sld [smem:[#allocation0]]
  $region45: #{tpu_custom_call.1} parent=0
    _
  %s6 = ssub.s32 1, %s4
  %s7 = scalar_select 0, %s6, %s4
  $region1: #{tpu_custom_call.1} parent=0
    #allocation2 [shape = 'u8[262144]{0}', space=vmem, size = 0x40000, scoped, tag = 'output window, operand 0']
    #allocation3 [shape = 's32[2]{0}', space=sflag, size = 0x8, scoped, tag = 'scoped memory for tpu_custom_call.1']
    %8 = vsyncpa [#allocation3], 0
    %s9 = scalar_lea.sflag [#allocation3], 1
    %10 = vsyncpa %s9, 0
    loop: start=0, step=1, limit=4
    $region2: #{tpu_custom_call.1} parent=1 // loop_pre_header
      _
    $region3: #{tpu_custom_call.1} parent=1 // loop_header
      %s12 = sphi 0, %s16
      %p13 = scmp.ge.s32.totalorder %s12, 4
      %s19 = sphi 0, %s31
      %s20 = sphi 0, %s27
      %s21 = sphi 0, %s19
      %s22 = sphi 0, %s20
      %s23 = sphi 0, %s21
      %s24 = sphi 0, %s22
      %s36 = sphi 0, %s38
      %s39 = sphi 0, %s36
      %s40 = sphi 0, %s39
      %s56 = sphi 0, %s40
      %s60 = sphi 0, %s60
      %s62 = sphi 0, %s60
      %s63 = sphi 0, %s62
      %s77 = sphi 0, %s63
      %s81 = sphi 0, %s81
      %s83 = sphi 0, %s81
      %s84 = sphi 0, %s83
      %s98 = sphi 0, %s84
      %s106 = sphi 0, %s108
      %s109 = sphi 0, %s106
      %s110 = sphi 0, %s109
      %s126 = sphi 0, %s110
    $region4: #{tpu_custom_call.1} parent=1 // loop_header_branch
      %15 = sbr.rel (%p13) target = $region8
    $region5: #{tpu_custom_call.1} parent=1 // loop_body
      %s17 = ssub.s32 %s12, 1
      %s18 = ssub.s32 %s12, 2
      %s25 = sadd.s32 1, %s20
      %p26 = scmp.ge.s32.totalorder %s25, 1
      %s27 = scalar_select %p26, 0, %s25
      %s28 = sadd.s32 1, %s19
      %s29 = scalar_select %p26, %s28, %s19
      %p30 = scmp.ge.s32.totalorder %s29, 2
      %s31 = scalar_select %p30, 0, %s29
      %s32 = ssub.s32 %s19, %s31
      %s33 = ssub.s32 %s20, %s27
      %s34 = sor.u32 %s32, %s33
      %p35 = scmp.eq.s32.totalorder %s34, 0
      %s37 = sadd.s32 %s36, 1
      %s38 = scalar_select %p35, %s36, %s37
      %p41 = pneg %p35
      %p42 = scmp.eq.s32.totalorder %s12, 1
      %p43 = por %p41, %p42
      %p44 = scmp.ne.s32.totalorder %s36, %s39
      %p45 = scmp.eq.s32.totalorder %s12, 0
      %p46 = por %p44, %p45
      %p47 = scmp.ne.s32.totalorder %s36, %s39
      %p48 = scmp.eq.s32.totalorder %s17, 1
      %p49 = por %p47, %p48
      %p50 = scmp.ne.s32.totalorder %s39, %s40
      %p51 = scmp.eq.s32.totalorder %s17, 0
      %p52 = por %p50, %p51
      %p53 = scmp.ne.s32.totalorder %s39, %s40
      %p54 = scmp.eq.s32.totalorder %s18, 1
      %p55 = por %p53, %p54
      %p57 = scmp.ne.s32.totalorder %s40, %s56
      %p58 = scmp.eq.s32.totalorder %s18, 0
      %p59 = por %p57, %p58
      %s61 = sadd.s32 %s60, 1
      %p64 = scmp.eq.s32.totalorder %s12, 1
      %p65 = scmp.ne.s32.totalorder %s60, %s62
      %p66 = scmp.eq.s32.totalorder %s12, 0
      %p67 = por %p65, %p66
      %p68 = scmp.ne.s32.totalorder %s60, %s62
      %p69 = scmp.eq.s32.totalorder %s17, 1
      %p70 = por %p68, %p69
      %p71 = scmp.ne.s32.totalorder %s62, %s63
      %p72 = scmp.eq.s32.totalorder %s17, 0
      %p73 = por %p71, %p72
      %p74 = scmp.ne.s32.totalorder %s62, %s63
      %p75 = scmp.eq.s32.totalorder %s18, 1
      %p76 = por %p74, %p75
      %p78 = scmp.ne.s32.totalorder %s63, %s77
      %p79 = scmp.eq.s32.totalorder %s18, 0
      %p80 = por %p78, %p79
      %s82 = sadd.s32 %s81, 1
      %p85 = scmp.eq.s32.totalorder %s12, 1
      %p86 = scmp.ne.s32.totalorder %s81, %s83
      %p87 = scmp.eq.s32.totalorder %s12, 0
      %p88 = por %p86, %p87
      %p89 = scmp.ne.s32.totalorder %s81, %s83
      %p90 = scmp.eq.s32.totalorder %s17, 1
      %p91 = por %p89, %p90
      %p92 = scmp.ne.s32.totalorder %s83, %s84
      %p93 = scmp.eq.s32.totalorder %s17, 0
      %p94 = por %p92, %p93
      %p95 = scmp.ne.s32.totalorder %s83, %s84
      %p96 = scmp.eq.s32.totalorder %s18, 1
      %p97 = por %p95, %p96
      %p99 = scmp.ne.s32.totalorder %s84, %s98
      %p100 = scmp.eq.s32.totalorder %s18, 0
      %p101 = por %p99, %p100
      %s102 = ssub.s32 %s19, %s31
      %s103 = ssub.s32 %s20, %s27
      %s104 = sor.u32 %s102, %s103
      %p105 = scmp.eq.s32.totalorder %s104, 0
      %s107 = sadd.s32 %s106, 1
      %s108 = scalar_select %p105, %s106, %s107
      %p111 = pneg %p105
      %p112 = scmp.eq.s32.totalorder %s12, 1
      %p113 = por %p111, %p112
      %p114 = scmp.ne.s32.totalorder %s106, %s109
      %p115 = scmp.eq.s32.totalorder %s12, 0
      %p116 = por %p114, %p115
      %p117 = scmp.ne.s32.totalorder %s106, %s109
      %p118 = scmp.eq.s32.totalorder %s17, 1
      %p119 = por %p117, %p118
      %p120 = scmp.ne.s32.totalorder %s109, %s110
      %p121 = scmp.eq.s32.totalorder %s17, 0
      %p122 = por %p120, %p121
      %p123 = scmp.ne.s32.totalorder %s109, %s110
      %p124 = scmp.eq.s32.totalorder %s18, 1
      %p125 = por %p123, %p124
      %p127 = scmp.ne.s32.totalorder %s110, %s126
      %p128 = scmp.eq.s32.totalorder %s18, 0
      %p129 = por %p127, %p128
      %p130 = scmp.le.s32.totalorder 1, %s12
      %p131 = scmp.lt.s32.totalorder %s12, 3
      %p132 = pnand %p130, %p131
      %p133 = pneg %p132
      // Predicated region
      $region9: #{tpu_custom_call.1} parent=5 // pred_check
        _
      $region10: #{tpu_custom_call.1} parent=5 // pred_check_branch
        %135 = sbr.rel (%p132) target = $region12
      $region11: #{tpu_custom_call.1} parent=5 // pred_region
        %s136 = ssub.s32 %s12, 1
        // Predicated region
        $region13: #{tpu_custom_call.1} parent=11 // pred_check
          %p137 = pneg %p73
        $region14: #{tpu_custom_call.1} parent=11 // pred_check_branch
          %139 = sbr.rel (%p137) target = $region16
        $region15: #{tpu_custom_call.1} parent=11 // pred_region
          _
        $region16: #{tpu_custom_call.1} parent=11 // pred_fallthru
          _
        // Predicated region
        $region17: #{tpu_custom_call.1} parent=11 // pred_check
          %p140 = pneg %p94
        $region18: #{tpu_custom_call.1} parent=11 // pred_check_branch
          %142 = sbr.rel (%p140) target = $region20
        $region19: #{tpu_custom_call.1} parent=11 // pred_region
          _
        $region20: #{tpu_custom_call.1} parent=11 // pred_fallthru
          _
      $region12: #{tpu_custom_call.1} parent=5 // pred_fallthru
        _
      %p143 = scmp.lt.s32.totalorder %s12, 2
      // Predicated region
      $region21: #{tpu_custom_call.1} parent=5 // pred_check
        %p144 = pneg %p143
      $region22: #{tpu_custom_call.1} parent=5 // pred_check_branch
        %146 = sbr.rel (%p144) target = $region24
      $region23: #{tpu_custom_call.1} parent=5 // pred_region
        // Predicated region
        $region25: #{tpu_custom_call.1} parent=23 // pred_check
          %p147 = pneg %p46
        $region26: #{tpu_custom_call.1} parent=23 // pred_check_branch
          %149 = sbr.rel (%p147) target = $region28
        $region27: #{tpu_custom_call.1} parent=23 // pred_region
          %s150 = smul.u32 2, %s20
          %p151 = scmp.lt.s32.totalorder %s19, 1
          %s152 = scalar_select %p151, %s19, 1
          %p153 = scmp.lt.s32.totalorder %s150, 1
          %s154 = scalar_select %p153, %s150, 1
          %s155 = smul.addr %s152, 16
          %s156 = sadd.s32 %s154, %s155
          %s157 = smul.addr %s156, 8
          %s158 = scalar_lea.vmem %s0, %s157
          %s159 = smul.u32 2, %s20
        $region28: #{tpu_custom_call.1} parent=23 // pred_fallthru
          _
      $region24: #{tpu_custom_call.1} parent=5 // pred_fallthru
        _
      %p160 = scmp.le.s32.totalorder 1, %s12
      %p161 = scmp.lt.s32.totalorder %s12, 3
      %p162 = pnand %p160, %p161
      %p163 = pneg %p162
      // Predicated region
      $region29: #{tpu_custom_call.1} parent=5 // pred_check
        _
      $region30: #{tpu_custom_call.1} parent=5 // pred_check_branch
        %165 = sbr.rel (%p162) target = $region32
      $region31: #{tpu_custom_call.1} parent=5 // pred_region
        %s166 = ssub.s32 %s12, 1
        %s167 = smul.u32 2, %s22
        %p168 = scmp.lt.s32.totalorder %s21, 1
        %s169 = scalar_select %p168, %s21, 1
        %p170 = scmp.lt.s32.totalorder %s167, 1
        %s171 = scalar_select %p170, %s167, 1
        %s172 = smul.addr %s169, 16
        %s173 = sadd.s32 %s171, %s172
        %s174 = smul.addr %s173, 8
        %s175 = scalar_lea.vmem %s0, %s174
        %p176 = pneg %p52
        %p177 = pneg %p49
        %p178 = pneg %p73
        %p179 = pneg %p70
        %p180 = pneg %p94
        %p181 = pneg %p91
        %p182 = pneg %p122
        %p183 = pneg %p119
        %s184 = sand.u32 %s109, 1
        %s185 = scalar_lea.sflag [#allocation3], %s184
        %s186 = sand.u32 %s109, 1
        %s187 = smul.addr %s186, 256
        %s188 = scalar_lea.vmem [#allocation2], %s187
        %s189 = smul.u32 2, %s22
        %p190 = scmp.lt.s32.totalorder %s21, 1
        %s191 = scalar_select %p190, %s21, 1
        %p192 = scmp.lt.s32.totalorder %s189, 1
        %s193 = scalar_select %p192, %s189, 1
        %s194 = smul.addr %s191, 16
        %s195 = sadd.s32 %s193, %s194
        %s196 = smul.addr %s195, 8
        %s197 = scalar_lea.vmem %s0, %s196
        %s198 = smul.u32 2, %s22
        %s199 = smul.u32 2, %s22
        %v200 = vld [vmem:[%s197] sm:$0xff]
        %v201 = vld [vmem:[%s197 + $0x8] sm:$0xff]
        %v202 = vld [vmem:[%s197 + $0x10] sm:$0xff]
        %v203 = vld [vmem:[%s197 + $0x18] sm:$0xff]
        %v204 = vld [vmem:[%s197 + $0x20] sm:$0xff]
        %v205 = vld [vmem:[%s197 + $0x28] sm:$0xff]
        %v206 = vld [vmem:[%s197 + $0x30] sm:$0xff]
        %v207 = vld [vmem:[%s197 + $0x38] sm:$0xff]
        %v208 = vld [vmem:[%s197 + $0x40] sm:$0xff]
        %v209 = vld [vmem:[%s197 + $0x48] sm:$0xff]
        %v210 = vld [vmem:[%s197 + $0x50] sm:$0xff]
        %v211 = vld [vmem:[%s197 + $0x58] sm:$0xff]
        %v212 = vld [vmem:[%s197 + $0x60] sm:$0xff]
        %v213 = vld [vmem:[%s197 + $0x68] sm:$0xff]
        %v214 = vld [vmem:[%s197 + $0x70] sm:$0xff]
        %v215 = vld [vmem:[%s197 + $0x78] sm:$0xff]
        %v216 = vld [vmem:[%s1] sm:$0xff]
        %v217 = vld [vmem:[%s1 + $0x8] sm:$0xff]
        %v218 = vld [vmem:[%s1 + $0x10] sm:$0xff]
        %v219 = vld [vmem:[%s1 + $0x18] sm:$0xff]
        %v220 = vld [vmem:[%s1 + $0x20] sm:$0xff]
        %v221 = vld [vmem:[%s1 + $0x28] sm:$0xff]
        %v222 = vld [vmem:[%s1 + $0x30] sm:$0xff]
        %v223 = vld [vmem:[%s1 + $0x38] sm:$0xff]
        %v224 = vld [vmem:[%s1 + $0x40] sm:$0xff]
        %v225 = vld [vmem:[%s1 + $0x48] sm:$0xff]
        %v226 = vld [vmem:[%s1 + $0x50] sm:$0xff]
        %v227 = vld [vmem:[%s1 + $0x58] sm:$0xff]
        %v228 = vld [vmem:[%s1 + $0x60] sm:$0xff]
        %v229 = vld [vmem:[%s1 + $0x68] sm:$0xff]
        %v230 = vld [vmem:[%s1 + $0x70] sm:$0xff]
        %v231 = vld [vmem:[%s1 + $0x78] sm:$0xff]
        %v232 = vld [vmem:[%s2] sm:$0xff]
        %v233 = vld [vmem:[%s2 + $0x8] sm:$0xff]
        %v234 = vld [vmem:[%s2 + $0x10] sm:$0xff]
        %v235 = vld [vmem:[%s2 + $0x18] sm:$0xff]
        %v236 = vld [vmem:[%s2 + $0x20] sm:$0xff]
        %v237 = vld [vmem:[%s2 + $0x28] sm:$0xff]
        %v238 = vld [vmem:[%s2 + $0x30] sm:$0xff]
        %v239 = vld [vmem:[%s2 + $0x38] sm:$0xff]
        %v240 = vld [vmem:[%s2 + $0x40] sm:$0xff]
        %v241 = vld [vmem:[%s2 + $0x48] sm:$0xff]
        %v242 = vld [vmem:[%s2 + $0x50] sm:$0xff]
        %v243 = vld [vmem:[%s2 + $0x58] sm:$0xff]
        %v244 = vld [vmem:[%s2 + $0x60] sm:$0xff]
        %v245 = vld [vmem:[%s2 + $0x68] sm:$0xff]
        %v246 = vld [vmem:[%s2 + $0x70] sm:$0xff]
        %v247 = vld [vmem:[%s2 + $0x78] sm:$0xff]
        %249 = vset.pattern.permute.xlu0 0
        %250 = vperm.xlu0 %249, %v232
        %v251 = vpop.permute.xlu0 %250
        %254 = vset.pattern.permute.xlu0 0
        %255 = vperm.xlu0 %254, %v233
        %v256 = vpop.permute.xlu0 %255
        %259 = vset.pattern.permute.xlu0 0
        %260 = vperm.xlu0 %259, %v234
        %v261 = vpop.permute.xlu0 %260
        %264 = vset.pattern.permute.xlu0 0
        %265 = vperm.xlu0 %264, %v235
        %v266 = vpop.permute.xlu0 %265
        %269 = vset.pattern.permute.xlu0 0
        %270 = vperm.xlu0 %269, %v236
        %v271 = vpop.permute.xlu0 %270
        %274 = vset.pattern.permute.xlu0 0
        %275 = vperm.xlu0 %274, %v237
        %v276 = vpop.permute.xlu0 %275
        %279 = vset.pattern.permute.xlu0 0
        %280 = vperm.xlu0 %279, %v238
        %v281 = vpop.permute.xlu0 %280
        %284 = vset.pattern.permute.xlu0 0
        %285 = vperm.xlu0 %284, %v239
        %v286 = vpop.permute.xlu0 %285
        %289 = vset.pattern.permute.xlu0 0
        %290 = vperm.xlu0 %289, %v240
        %v291 = vpop.permute.xlu0 %290
        %294 = vset.pattern.permute.xlu0 0
        %295 = vperm.xlu0 %294, %v241
        %v296 = vpop.permute.xlu0 %295
        %299 = vset.pattern.permute.xlu0 0
        %300 = vperm.xlu0 %299, %v242
        %v301 = vpop.permute.xlu0 %300
        %304 = vset.pattern.permute.xlu0 0
        %305 = vperm.xlu0 %304, %v243
        %v306 = vpop.permute.xlu0 %305
        %309 = vset.pattern.permute.xlu0 0
        %310 = vperm.xlu0 %309, %v244
        %v311 = vpop.permute.xlu0 %310
        %314 = vset.pattern.permute.xlu0 0
        %315 = vperm.xlu0 %314, %v245
        %v316 = vpop.permute.xlu0 %315
        %319 = vset.pattern.permute.xlu0 0
        %320 = vperm.xlu0 %319, %v246
        %v321 = vpop.permute.xlu0 %320
        %324 = vset.pattern.permute.xlu0 0
        %325 = vperm.xlu0 %324, %v247
        %v326 = vpop.permute.xlu0 %325
        %vm328 = vcmask 523264
        %v330 = vsel %vm328, %v216, 0
        %v333 = vsel %vm328, %v217, 0
        %v336 = vsel %vm328, %v218, 0
        %v339 = vsel %vm328, %v219, 0
        %v342 = vsel %vm328, %v220, 0
        %v345 = vsel %vm328, %v221, 0
        %v348 = vsel %vm328, %v222, 0
        %v351 = vsel %vm328, %v223, 0
        %v354 = vsel %vm328, %v224, 0
        %v357 = vsel %vm328, %v225, 0
        %v360 = vsel %vm328, %v226, 0
        %v363 = vsel %vm328, %v227, 0
        %v366 = vsel %vm328, %v228, 0
        %v369 = vsel %vm328, %v229, 0
        %v372 = vsel %vm328, %v230, 0
        %v375 = vsel %vm328, %v231, 0
        %v377 = vand.u32 %v201, 4294901760
        %378 = vmatprep.subr.mxu0 %v377
        %v379 = vand.u32 %v200, 4294901760
        %380 = vmatpush1.msra.mxu0 %v379
        %v381 = vand.u32 %v203, 4294901760
        %382 = vmatprep.subr.mxu0 %v381
        %v383 = vand.u32 %v202, 4294901760
        %384 = vmatpush1.msra.mxu0 %v383
        %v385 = vand.u32 %v205, 4294901760
        %386 = vmatprep.subr.mxu0 %v385
        %v387 = vand.u32 %v204, 4294901760
        %388 = vmatpush1.msra.mxu0 %v387
        %v389 = vand.u32 %v207, 4294901760
        %390 = vmatprep.subr.mxu0 %v389
        %v391 = vand.u32 %v206, 4294901760
        %392 = vmatpush1.msra.mxu0 %v391
        %v393 = vand.u32 %v209, 4294901760
        %394 = vmatprep.subr.mxu0 %v393
        %v395 = vand.u32 %v208, 4294901760
        %396 = vmatpush1.msra.mxu0 %v395
        %v397 = vand.u32 %v211, 4294901760
        %398 = vmatprep.subr.mxu0 %v397
        %v399 = vand.u32 %v210, 4294901760
        %400 = vmatpush1.msra.mxu0 %v399
        %v401 = vand.u32 %v213, 4294901760
        %402 = vmatprep.subr.mxu0 %v401
        %v403 = vand.u32 %v212, 4294901760
        %404 = vmatpush1.msra.mxu0 %v403
        %v405 = vand.u32 %v215, 4294901760
        %406 = vmatprep.subr.mxu0 %v405
        %v407 = vand.u32 %v214, 4294901760
        %408 = vmatpush1.msra.mxu0 %v407
        %409 = vmatprep.subr.mxu0 0.0
        %410 = vmatpush1.msra.mxu0 0.0
        %411 = vmatprep.subr.mxu0 0.0
        %412 = vmatpush1.msra.mxu0 0.0
        %413 = vmatprep.subr.mxu0 0.0
        %414 = vmatpush1.msra.mxu0 0.0
        %415 = vmatprep.subr.mxu0 0.0
        %416 = vmatpush1.msra.mxu0 0.0
        %417 = vmatprep.subr.mxu0 0.0
        %418 = vmatpush1.msra.mxu0 0.0
        %419 = vmatprep.subr.mxu0 0.0
        %420 = vmatpush1.msra.mxu0 0.0
        %421 = vmatprep.subr.mxu0 0.0
        %422 = vmatpush1.msra.mxu0 0.0
        %423 = vmatprep.subr.mxu0 0.0
        %424 = vmatpush1.msra.mxu0 0.0
        %425 = vmatprep.subr.mxu0 0.0
        %426 = vmatpush1.msra.mxu0 0.0
        %427 = vmatprep.subr.mxu0 0.0
        %428 = vmatpush1.msra.mxu0 0.0
        %429 = vmatprep.subr.mxu0 0.0
        %430 = vmatpush1.msra.mxu0 0.0
        %431 = vmatprep.subr.mxu0 0.0
        %432 = vmatpush1.msra.mxu0 0.0
        %433 = vmatprep.subr.mxu0 0.0
        %434 = vmatpush1.msra.mxu0 0.0
        %435 = vmatprep.subr.mxu0 0.0
        %436 = vmatpush1.msra.mxu0 0.0
        %437 = vmatprep.subr.mxu0 0.0
        %438 = vmatpush1.msra.mxu0 0.0
        %439 = vmatprep.subr.mxu0 0.0
        %440 = vmatpush1.msra.mxu0 0.0
        %441 = vmatprep.subr.mxu0 0.0
        %442 = vmatpush1.msra.mxu0 0.0
        %443 = vmatprep.subr.mxu0 0.0
        %444 = vmatpush1.msra.mxu0 0.0
        %445 = vmatprep.subr.mxu0 0.0
        %446 = vmatpush1.msra.mxu0 0.0
        %447 = vmatprep.subr.mxu0 0.0
        %448 = vmatpush1.msra.mxu0 0.0
        %449 = vmatprep.subr.mxu0 0.0
        %450 = vmatpush1.msra.mxu0 0.0
        %451 = vmatprep.subr.mxu0 0.0
        %452 = vmatpush1.msra.mxu0 0.0
        %453 = vmatprep.subr.mxu0 0.0
        %454 = vmatpush1.msra.mxu0 0.0
        %455 = vmatprep.subr.mxu0 0.0
        %456 = vmatpush1.msra.mxu0 0.0
        %457 = vmatprep.mubr.f32.mxu0 0.0
        %v458 = vand.u32 %v330, 4294901760
        %v459 = vsub.f32 %v330, %v458
        %v460 = vand.u32 %v459, 4294901760
        %v461 = vsub.f32 %v459, %v460
        %v462 = vand.u32 %v461, 4294901760
        %463 = vmatmul.mubr.f32.gmra.mrb[0].mxu0 %v462
        %v464 = vpop.f32.mrb[0].mxu0
        %v465 = vadd.f32 %v251, %v464
        %v466 = vpop.f32.mrb[0].mxu0
        %v467 = vadd.f32 %v251, %v466
        %468 = vmatprep.mubr.f32.mxu0 0.0
        %v469 = vand.u32 %v333, 4294901760
        %v470 = vsub.f32 %v333, %v469
        %v471 = vand.u32 %v470, 4294901760
        %v472 = vsub.f32 %v470, %v471
        %v473 = vand.u32 %v472, 4294901760
        %474 = vmatmul.mubr.f32.gmra.mrb[0].mxu0 %v473
        %v475 = vpop.f32.mrb[0].mxu0
        %v476 = vadd.f32 %v256, %v475
        %v477 = vpop.f32.mrb[0].mxu0
        %v478 = vadd.f32 %v256, %v477
        %479 = vmatprep.mubr.f32.mxu0 0.0
        %v480 = vand.u32 %v336, 4294901760
        %v481 = vsub.f32 %v336, %v480
        %v482 = vand.u32 %v481, 4294901760
        %v483 = vsub.f32 %v481, %v482
        %v484 = vand.u32 %v483, 4294901760
        %485 = vmatmul.mubr.f32.gmra.mrb[0].mxu0 %v484
        %v486 = vpop.f32.mrb[0].mxu0
        %v487 = vadd.f32 %v261, %v486
        %v488 = vpop.f32.mrb[0].mxu0
        %v489 = vadd.f32 %v261, %v488
        %490 = vmatprep.mubr.f32.mxu0 0.0
        %v491 = vand.u32 %v339, 4294901760
        %v492 = vsub.f32 %v339, %v491
        %v493 = vand.u32 %v492, 4294901760
        %v494 = vsub.f32 %v492, %v493
        %v495 = vand.u32 %v494, 4294901760
        %496 = vmatmul.mubr.f32.gmra.mrb[0].mxu0 %v495
        %v497 = vpop.f32.mrb[0].mxu0
        %v498 = vadd.f32 %v266, %v497
        %v499 = vpop.f32.mrb[0].mxu0
        %v500 = vadd.f32 %v266, %v499
        %501 = vmatprep.mubr.f32.mxu0 0.0
        %v502 = vand.u32 %v342, 4294901760
        %v503 = vsub.f32 %v342, %v502
        %v504 = vand.u32 %v503, 4294901760
        %v505 = vsub.f32 %v503, %v504
        %v506 = vand.u32 %v505, 4294901760
        %507 = vmatmul.mubr.f32.gmra.mrb[0].mxu0 %v506
        %v508 = vpop.f32.mrb[0].mxu0
        %v509 = vadd.f32 %v271, %v508
        %v510 = vpop.f32.mrb[0].mxu0
        %v511 = vadd.f32 %v271, %v510
        %512 = vmatprep.mubr.f32.mxu0 0.0
        %v513 = vand.u32 %v345, 4294901760
        %v514 = vsub.f32 %v345, %v513
        %v515 = vand.u32 %v514, 4294901760
        %v516 = vsub.f32 %v514, %v515
        %v517 = vand.u32 %v516, 4294901760
        %518 = vmatmul.mubr.f32.gmra.mrb[0].mxu0 %v517
        %v519 = vpop.f32.mrb[0].mxu0
        %v520 = vadd.f32 %v276, %v519
        %v521 = vpop.f32.mrb[0].mxu0
        %v522 = vadd.f32 %v276, %v521
        %523 = vmatprep.mubr.f32.mxu0 0.0
        %v524 = vand.u32 %v348, 4294901760
        %v525 = vsub.f32 %v348, %v524
        %v526 = vand.u32 %v525, 4294901760
        %v527 = vsub.f32 %v525, %v526
        %v528 = vand.u32 %v527, 4294901760
        %529 = vmatmul.mubr.f32.gmra.mrb[0].mxu0 %v528
        %v530 = vpop.f32.mrb[0].mxu0
        %v531 = vadd.f32 %v281, %v530
        %v532 = vpop.f32.mrb[0].mxu0
        %v533 = vadd.f32 %v281, %v532
        %534 = vmatprep.mubr.f32.mxu0 0.0
        %v535 = vand.u32 %v351, 4294901760
        %v536 = vsub.f32 %v351, %v535
        %v537 = vand.u32 %v536, 4294901760
        %v538 = vsub.f32 %v536, %v537
        %v539 = vand.u32 %v538, 4294901760
        %540 = vmatmul.mubr.f32.gmra.mrb[0].mxu0 %v539
        %v541 = vpop.f32.mrb[0].mxu0
        %v542 = vadd.f32 %v286, %v541
        %v543 = vpop.f32.mrb[0].mxu0
        %v544 = vadd.f32 %v286, %v543
        %545 = vmatprep.mubr.f32.mxu0 0.0
        %v546 = vand.u32 %v354, 4294901760
        %v547 = vsub.f32 %v354, %v546
        %v548 = vand.u32 %v547, 4294901760
        %v549 = vsub.f32 %v547, %v548
        %v550 = vand.u32 %v549, 4294901760
        %551 = vmatmul.mubr.f32.gmra.mrb[0].mxu0 %v550
        %v552 = vpop.f32.mrb[0].mxu0
        %v553 = vadd.f32 %v291, %v552
        %v554 = vpop.f32.mrb[0].mxu0
        %v555 = vadd.f32 %v291, %v554
        %556 = vmatprep.mubr.f32.mxu0 0.0
        %v557 = vand.u32 %v357, 4294901760
        %v558 = vsub.f32 %v357, %v557
        %v559 = vand.u32 %v558, 4294901760
        %v560 = vsub.f32 %v558, %v559
        %v561 = vand.u32 %v560, 4294901760
        %562 = vmatmul.mubr.f32.gmra.mrb[0].mxu0 %v561
        %v563 = vpop.f32.mrb[0].mxu0
        %v564 = vadd.f32 %v296, %v563
        %v565 = vpop.f32.mrb[0].mxu0
        %v566 = vadd.f32 %v296, %v565
        %567 = vmatprep.mubr.f32.mxu0 0.0
        %v568 = vand.u32 %v360, 4294901760
        %v569 = vsub.f32 %v360, %v568
        %v570 = vand.u32 %v569, 4294901760
        %v571 = vsub.f32 %v569, %v570
        %v572 = vand.u32 %v571, 4294901760
        %573 = vmatmul.mubr.f32.gmra.mrb[0].mxu0 %v572
        %v574 = vpop.f32.mrb[0].mxu0
        %v575 = vadd.f32 %v301, %v574
        %v576 = vpop.f32.mrb[0].mxu0
        %v577 = vadd.f32 %v301, %v576
        %578 = vmatprep.mubr.f32.mxu0 0.0
        %v579 = vand.u32 %v363, 4294901760
        %v580 = vsub.f32 %v363, %v579
        %v581 = vand.u32 %v580, 4294901760
        %v582 = vsub.f32 %v580, %v581
        %v583 = vand.u32 %v582, 4294901760
        %584 = vmatmul.mubr.f32.gmra.mrb[0].mxu0 %v583
        %v585 = vpop.f32.mrb[0].mxu0
        %v586 = vadd.f32 %v306, %v585
        %v587 = vpop.f32.mrb[0].mxu0
        %v588 = vadd.f32 %v306, %v587
        %589 = vmatprep.mubr.f32.mxu0 0.0
        %v590 = vand.u32 %v366, 4294901760
        %v591 = vsub.f32 %v366, %v590
        %v592 = vand.u32 %v591, 4294901760
        %v593 = vsub.f32 %v591, %v592
        %v594 = vand.u32 %v593, 4294901760
        %595 = vmatmul.mubr.f32.gmra.mrb[0].mxu0 %v594
        %v596 = vpop.f32.mrb[0].mxu0
        %v597 = vadd.f32 %v311, %v596
        %v598 = vpop.f32.mrb[0].mxu0
        %v599 = vadd.f32 %v311, %v598
        %600 = vmatprep.mubr.f32.mxu0 0.0
        %v601 = vand.u32 %v369, 4294901760
        %v602 = vsub.f32 %v369, %v601
        %v603 = vand.u32 %v602, 4294901760
        %v604 = vsub.f32 %v602, %v603
        %v605 = vand.u32 %v604, 4294901760
        %606 = vmatmul.mubr.f32.gmra.mrb[0].mxu0 %v605
        %v607 = vpop.f32.mrb[0].mxu0
        %v608 = vadd.f32 %v316, %v607
        %v609 = vpop.f32.mrb[0].mxu0
        %v610 = vadd.f32 %v316, %v609
        %611 = vmatprep.mubr.f32.mxu0 0.0
        %v612 = vand.u32 %v372, 4294901760
        %v613 = vsub.f32 %v372, %v612
        %v614 = vand.u32 %v613, 4294901760
        %v615 = vsub.f32 %v613, %v614
        %v616 = vand.u32 %v615, 4294901760
        %617 = vmatmul.mubr.f32.gmra.mrb[0].mxu0 %v616
        %v618 = vpop.f32.mrb[0].mxu0
        %v619 = vadd.f32 %v321, %v618
        %v620 = vpop.f32.mrb[0].mxu0
        %v621 = vadd.f32 %v321, %v620
        %622 = vmatprep.mubr.f32.mxu0 0.0
        %v623 = vand.u32 %v375, 4294901760
        %v624 = vsub.f32 %v375, %v623
        %v625 = vand.u32 %v624, 4294901760
        %v626 = vsub.f32 %v624, %v625
        %v627 = vand.u32 %v626, 4294901760
        %628 = vmatmul.mubr.f32.gmra.mrb[0].mxu0 %v627
        %v629 = vpop.f32.mrb[0].mxu0
        %v630 = vadd.f32 %v326, %v629
        %v631 = vpop.f32.mrb[0].mxu0
        %v632 = vadd.f32 %v326, %v631
        %633 = vdwg.mxu0
        %v634 = vand.u32 %v201, 4294901760
        %v635 = vsub.f32 %v201, %v634
        %v636 = vand.u32 %v635, 4294901760
        %v637 = vsub.f32 %v635, %v636
        %v638 = vand.u32 %v637, 4294901760
        %639 = vmatprep.subr.mxu0 %v638
        %v640 = vand.u32 %v200, 4294901760
        %v641 = vsub.f32 %v200, %v640
        %v642 = vand.u32 %v641, 4294901760
        %v643 = vsub.f32 %v641, %v642
        %v644 = vand.u32 %v643, 4294901760
        %645 = vmatpush1.msra.mxu0 %v644
        %v646 = vand.u32 %v203, 4294901760
        %v647 = vsub.f32 %v203, %v646
        %v648 = vand.u32 %v647, 4294901760
        %v649 = vsub.f32 %v647, %v648
        %v650 = vand.u32 %v649, 4294901760
        %651 = vmatprep.subr.mxu0 %v650
        %v652 = vand.u32 %v202, 4294901760
        %v653 = vsub.f32 %v202, %v652
        %v654 = vand.u32 %v653, 4294901760
        %v655 = vsub.f32 %v653, %v654
        %v656 = vand.u32 %v655, 4294901760
        %657 = vmatpush1.msra.mxu0 %v656
        %v658 = vand.u32 %v205, 4294901760
        %v659 = vsub.f32 %v205, %v658
        %v660 = vand.u32 %v659, 4294901760
        %v661 = vsub.f32 %v659, %v660
        %v662 = vand.u32 %v661, 4294901760
        %663 = vmatprep.subr.mxu0 %v662
        %v664 = vand.u32 %v204, 4294901760
        %v665 = vsub.f32 %v204, %v664
        %v666 = vand.u32 %v665, 4294901760
        %v667 = vsub.f32 %v665, %v666
        %v668 = vand.u32 %v667, 4294901760
        %669 = vmatpush1.msra.mxu0 %v668
        %v670 = vand.u32 %v207, 4294901760
        %v671 = vsub.f32 %v207, %v670
        %v672 = vand.u32 %v671, 4294901760
        %v673 = vsub.f32 %v671, %v672
        %v674 = vand.u32 %v673, 4294901760
        %675 = vmatprep.subr.mxu0 %v674
        %v676 = vand.u32 %v206, 4294901760
        %v677 = vsub.f32 %v206, %v676
        %v678 = vand.u32 %v677, 4294901760
        %v679 = vsub.f32 %v677, %v678
        %v680 = vand.u32 %v679, 4294901760
        %681 = vmatpush1.msra.mxu0 %v680
        %v682 = vand.u32 %v209, 4294901760
        %v683 = vsub.f32 %v209, %v682
        %v684 = vand.u32 %v683, 4294901760
        %v685 = vsub.f32 %v683, %v684
        %v686 = vand.u32 %v685, 4294901760
        %687 = vmatprep.subr.mxu0 %v686
        %v688 = vand.u32 %v208, 4294901760
        %v689 = vsub.f32 %v208, %v688
        %v690 = vand.u32 %v689, 4294901760
        %v691 = vsub.f32 %v689, %v690
        %v692 = vand.u32 %v691, 4294901760
        %693 = vmatpush1.msra.mxu0 %v692
        %v694 = vand.u32 %v211, 4294901760
        %v695 = vsub.f32 %v211, %v694
        %v696 = vand.u32 %v695, 4294901760
        %v697 = vsub.f32 %v695, %v696
        %v698 = vand.u32 %v697, 4294901760
        %699 = vmatprep.subr.mxu0 %v698
        %v700 = vand.u32 %v210, 4294901760
        %v701 = vsub.f32 %v210, %v700
        %v702 = vand.u32 %v701, 4294901760
        %v703 = vsub.f32 %v701, %v702
        %v704 = vand.u32 %v703, 4294901760
        %705 = vmatpush1.msra.mxu0 %v704
        %v706 = vand.u32 %v213, 4294901760
        %v707 = vsub.f32 %v213, %v706
        %v708 = vand.u32 %v707, 4294901760
        %v709 = vsub.f32 %v707, %v708
        %v710 = vand.u32 %v709, 4294901760
        %711 = vmatprep.subr.mxu0 %v710
        %v712 = vand.u32 %v212, 4294901760
        %v713 = vsub.f32 %v212, %v712
        %v714 = vand.u32 %v713, 4294901760
        %v715 = vsub.f32 %v713, %v714
        %v716 = vand.u32 %v715, 4294901760
        %717 = vmatpush1.msra.mxu0 %v716
        %v718 = vand.u32 %v215, 4294901760
        %v719 = vsub.f32 %v215, %v718
        %v720 = vand.u32 %v719, 4294901760
        %v721 = vsub.f32 %v719, %v720
        %v722 = vand.u32 %v721, 4294901760
        %723 = vmatprep.subr.mxu0 %v722
        %v724 = vand.u32 %v214, 4294901760
        %v725 = vsub.f32 %v214, %v724
        %v726 = vand.u32 %v725, 4294901760
        %v727 = vsub.f32 %v725, %v726
        %v728 = vand.u32 %v727, 4294901760
        %729 = vmatpush1.msra.mxu0 %v728
        %730 = vmatprep.subr.mxu0 0.0
        %731 = vmatpush1.msra.mxu0 0.0
        %732 = vmatprep.subr.mxu0 0.0
        %733 = vmatpush1.msra.mxu0 0.0
        %734 = vmatprep.subr.mxu0 0.0
        %735 = vmatpush1.msra.mxu0 0.0
        %736 = vmatprep.subr.mxu0 0.0
        %737 = vmatpush1.msra.mxu0 0.0
        %738 = vmatprep.subr.mxu0 0.0
        %739 = vmatpush1.msra.mxu0 0.0
        %740 = vmatprep.subr.mxu0 0.0
        %741 = vmatpush1.msra.mxu0 0.0
        %742 = vmatprep.subr.mxu0 0.0
        %743 = vmatpush1.msra.mxu0 0.0
        %744 = vmatprep.subr.mxu0 0.0
        %745 = vmatpush1.msra.mxu0 0.0
        %746 = vmatprep.subr.mxu0 0.0
        %747 = vmatpush1.msra.mxu0 0.0
        %748 = vmatprep.subr.mxu0 0.0
        %749 = vmatpush1.msra.mxu0 0.0
        %750 = vmatprep.subr.mxu0 0.0
        %751 = vmatpush1.msra.mxu0 0.0
        %752 = vmatprep.subr.mxu0 0.0
        %753 = vmatpush1.msra.mxu0 0.0
        %754 = vmatprep.subr.mxu0 0.0
        %755 = vmatpush1.msra.mxu0 0.0
        %756 = vmatprep.subr.mxu0 0.0
        %757 = vmatpush1.msra.mxu0 0.0
        %758 = vmatprep.subr.mxu0 0.0
        %759 = vmatpush1.msra.mxu0 0.0
        %760 = vmatprep.subr.mxu0 0.0
        %761 = vmatpush1.msra.mxu0 0.0
        %762 = vmatprep.subr.mxu0 0.0
        %763 = vmatpush1.msra.mxu0 0.0
        %764 = vmatprep.subr.mxu0 0.0
        %765 = vmatpush1.msra.mxu0 0.0
        %766 = vmatprep.subr.mxu0 0.0
        %767 = vmatpush1.msra.mxu0 0.0
        %768 = vmatprep.subr.mxu0 0.0
        %769 = vmatpush1.msra.mxu0 0.0
        %770 = vmatprep.subr.mxu0 0.0
        %771 = vmatpush1.msra.mxu0 0.0
        %772 = vmatprep.subr.mxu0 0.0
        %773 = vmatpush1.msra.mxu0 0.0
        %774 = vmatprep.subr.mxu0 0.0
        %775 = vmatpush1.msra.mxu0 0.0
        %776 = vmatprep.subr.mxu0 0.0
        %777 = vmatpush1.msra.mxu0 0.0
        %778 = vmatprep.mubr.f32.mxu0 0.0
        %v779 = vand.u32 %v330, 4294901760
        %780 = vmatmul.mubr.f32.gmra.mrb[0].mxu0 %v779
        %v781 = vpop.f32.mrb[0].mxu0
        %v782 = vadd.f32 %v465, %v781
        %v783 = vpop.f32.mrb[0].mxu0
        %v784 = vadd.f32 %v467, %v783
        %785 = vmatprep.mubr.f32.mxu0 0.0
        %v786 = vand.u32 %v333, 4294901760
        %787 = vmatmul.mubr.f32.gmra.mrb[0].mxu0 %v786
        %v788 = vpop.f32.mrb[0].mxu0
        %v789 = vadd.f32 %v476, %v788
        %v790 = vpop.f32.mrb[0].mxu0
        %v791 = vadd.f32 %v478, %v790
        %792 = vmatprep.mubr.f32.mxu0 0.0
        %v793 = vand.u32 %v336, 4294901760
        %794 = vmatmul.mubr.f32.gmra.mrb[0].mxu0 %v793
        %v795 = vpop.f32.mrb[0].mxu0
        %v796 = vadd.f32 %v487, %v795
        %v797 = vpop.f32.mrb[0].mxu0
        %v798 = vadd.f32 %v489, %v797
        %799 = vmatprep.mubr.f32.mxu0 0.0
        %v800 = vand.u32 %v339, 4294901760
        %801 = vmatmul.mubr.f32.gmra.mrb[0].mxu0 %v800
        %v802 = vpop.f32.mrb[0].mxu0
        %v803 = vadd.f32 %v498, %v802
        %v804 = vpop.f32.mrb[0].mxu0
        %v805 = vadd.f32 %v500, %v804
        %806 = vmatprep.mubr.f32.mxu0 0.0
        %v807 = vand.u32 %v342, 4294901760
        %808 = vmatmul.mubr.f32.gmra.mrb[0].mxu0 %v807
        %v809 = vpop.f32.mrb[0].mxu0
        %v810 = vadd.f32 %v509, %v809
        %v811 = vpop.f32.mrb[0].mxu0
        %v812 = vadd.f32 %v511, %v811
        %813 = vmatprep.mubr.f32.mxu0 0.0
        %v814 = vand.u32 %v345, 4294901760
        %815 = vmatmul.mubr.f32.gmra.mrb[0].mxu0 %v814
        %v816 = vpop.f32.mrb[0].mxu0
        %v817 = vadd.f32 %v520, %v816
        %v818 = vpop.f32.mrb[0].mxu0
        %v819 = vadd.f32 %v522, %v818
        %820 = vmatprep.mubr.f32.mxu0 0.0
        %v821 = vand.u32 %v348, 4294901760
        %822 = vmatmul.mubr.f32.gmra.mrb[0].mxu0 %v821
        %v823 = vpop.f32.mrb[0].mxu0
        %v824 = vadd.f32 %v531, %v823
        %v825 = vpop.f32.mrb[0].mxu0
        %v826 = vadd.f32 %v533, %v825
        %827 = vmatprep.mubr.f32.mxu0 0.0
        %v828 = vand.u32 %v351, 4294901760
        %829 = vmatmul.mubr.f32.gmra.mrb[0].mxu0 %v828
        %v830 = vpop.f32.mrb[0].mxu0
        %v831 = vadd.f32 %v542, %v830
        %v832 = vpop.f32.mrb[0].mxu0
        %v833 = vadd.f32 %v544, %v832
        %834 = vmatprep.mubr.f32.mxu0 0.0
        %v835 = vand.u32 %v354, 4294901760
        %836 = vmatmul.mubr.f32.gmra.mrb[0].mxu0 %v835
        %v837 = vpop.f32.mrb[0].mxu0
        %v838 = vadd.f32 %v553, %v837
        %v839 = vpop.f32.mrb[0].mxu0
        %v840 = vadd.f32 %v555, %v839
        %841 = vmatprep.mubr.f32.mxu0 0.0
        %v842 = vand.u32 %v357, 4294901760
        %843 = vmatmul.mubr.f32.gmra.mrb[0].mxu0 %v842
        %v844 = vpop.f32.mrb[0].mxu0
        %v845 = vadd.f32 %v564, %v844
        %v846 = vpop.f32.mrb[0].mxu0
        %v847 = vadd.f32 %v566, %v846
        %848 = vmatprep.mubr.f32.mxu0 0.0
        %v849 = vand.u32 %v360, 4294901760
        %850 = vmatmul.mubr.f32.gmra.mrb[0].mxu0 %v849
        %v851 = vpop.f32.mrb[0].mxu0
        %v852 = vadd.f32 %v575, %v851
        %v853 = vpop.f32.mrb[0].mxu0
        %v854 = vadd.f32 %v577, %v853
        %855 = vmatprep.mubr.f32.mxu0 0.0
        %v856 = vand.u32 %v363, 4294901760
        %857 = vmatmul.mubr.f32.gmra.mrb[0].mxu0 %v856
        %v858 = vpop.f32.mrb[0].mxu0
        %v859 = vadd.f32 %v586, %v858
        %v860 = vpop.f32.mrb[0].mxu0
        %v861 = vadd.f32 %v588, %v860
        %862 = vmatprep.mubr.f32.mxu0 0.0
        %v863 = vand.u32 %v366, 4294901760
        %864 = vmatmul.mubr.f32.gmra.mrb[0].mxu0 %v863
        %v865 = vpop.f32.mrb[0].mxu0
        %v866 = vadd.f32 %v597, %v865
        %v867 = vpop.f32.mrb[0].mxu0
        %v868 = vadd.f32 %v599, %v867
        %869 = vmatprep.mubr.f32.mxu0 0.0
        %v870 = vand.u32 %v369, 4294901760
        %871 = vmatmul.mubr.f32.gmra.mrb[0].mxu0 %v870
        %v872 = vpop.f32.mrb[0].mxu0
        %v873 = vadd.f32 %v608, %v872
        %v874 = vpop.f32.mrb[0].mxu0
        %v875 = vadd.f32 %v610, %v874
        %876 = vmatprep.mubr.f32.mxu0 0.0
        %v877 = vand.u32 %v372, 4294901760
        %878 = vmatmul.mubr.f32.gmra.mrb[0].mxu0 %v877
        %v879 = vpop.f32.mrb[0].mxu0
        %v880 = vadd.f32 %v619, %v879
        %v881 = vpop.f32.mrb[0].mxu0
        %v882 = vadd.f32 %v621, %v881
        %883 = vmatprep.mubr.f32.mxu0 0.0
        %v884 = vand.u32 %v375, 4294901760
        %885 = vmatmul.mubr.f32.gmra.mrb[0].mxu0 %v884
        %v886 = vpop.f32.mrb[0].mxu0
        %v887 = vadd.f32 %v630, %v886
        %v888 = vpop.f32.mrb[0].mxu0
        %v889 = vadd.f32 %v632, %v888
        %890 = vdwg.mxu0
        %v891 = vand.u32 %v201, 4294901760
        %v892 = vsub.f32 %v201, %v891
        %893 = vmatprep.subr.mxu0 %v892
        %v894 = vand.u32 %v200, 4294901760
        %v895 = vsub.f32 %v200, %v894
        %896 = vmatpush1.msra.mxu0 %v895
        %v897 = vand.u32 %v203, 4294901760
        %v898 = vsub.f32 %v203, %v897
        %899 = vmatprep.subr.mxu0 %v898
        %v900 = vand.u32 %v202, 4294901760
        %v901 = vsub.f32 %v202, %v900
        %902 = vmatpush1.msra.mxu0 %v901
        %v903 = vand.u32 %v205, 4294901760
        %v904 = vsub.f32 %v205, %v903
        %905 = vmatprep.subr.mxu0 %v904
        %v906 = vand.u32 %v204, 4294901760
        %v907 = vsub.f32 %v204, %v906
        %908 = vmatpush1.msra.mxu0 %v907
        %v909 = vand.u32 %v207, 4294901760
        %v910 = vsub.f32 %v207, %v909
        %911 = vmatprep.subr.mxu0 %v910
        %v912 = vand.u32 %v206, 4294901760
        %v913 = vsub.f32 %v206, %v912
        %914 = vmatpush1.msra.mxu0 %v913
        %v915 = vand.u32 %v209, 4294901760
        %v916 = vsub.f32 %v209, %v915
        %917 = vmatprep.subr.mxu0 %v916
        %v918 = vand.u32 %v208, 4294901760
        %v919 = vsub.f32 %v208, %v918
        %920 = vmatpush1.msra.mxu0 %v919
        %v921 = vand.u32 %v211, 4294901760
        %v922 = vsub.f32 %v211, %v921
        %923 = vmatprep.subr.mxu0 %v922
        %v924 = vand.u32 %v210, 4294901760
        %v925 = vsub.f32 %v210, %v924
        %926 = vmatpush1.msra.mxu0 %v925
        %v927 = vand.u32 %v213, 4294901760
        %v928 = vsub.f32 %v213, %v927
        %929 = vmatprep.subr.mxu0 %v928
        %v930 = vand.u32 %v212, 4294901760
        %v931 = vsub.f32 %v212, %v930
        %932 = vmatpush1.msra.mxu0 %v931
        %v933 = vand.u32 %v215, 4294901760
        %v934 = vsub.f32 %v215, %v933
        %935 = vmatprep.subr.mxu0 %v934
        %v936 = vand.u32 %v214, 4294901760
        %v937 = vsub.f32 %v214, %v936
        %938 = vmatpush1.msra.mxu0 %v937
        %939 = vmatprep.subr.mxu0 0.0
        %940 = vmatpush1.msra.mxu0 0.0
        %941 = vmatprep.subr.mxu0 0.0
        %942 = vmatpush1.msra.mxu0 0.0
        %943 = vmatprep.subr.mxu0 0.0
        %944 = vmatpush1.msra.mxu0 0.0
        %945 = vmatprep.subr.mxu0 0.0
        %946 = vmatpush1.msra.mxu0 0.0
        %947 = vmatprep.subr.mxu0 0.0
        %948 = vmatpush1.msra.mxu0 0.0
        %949 = vmatprep.subr.mxu0 0.0
        %950 = vmatpush1.msra.mxu0 0.0
        %951 = vmatprep.subr.mxu0 0.0
        %952 = vmatpush1.msra.mxu0 0.0
        %953 = vmatprep.subr.mxu0 0.0
        %954 = vmatpush1.msra.mxu0 0.0
        %955 = vmatprep.subr.mxu0 0.0
        %956 = vmatpush1.msra.mxu0 0.0
        %957 = vmatprep.subr.mxu0 0.0
        %958 = vmatpush1.msra.mxu0 0.0
        %959 = vmatprep.subr.mxu0 0.0
        %960 = vmatpush1.msra.mxu0 0.0
        %961 = vmatprep.subr.mxu0 0.0
        %962 = vmatpush1.msra.mxu0 0.0
        %963 = vmatprep.subr.mxu0 0.0
        %964 = vmatpush1.msra.mxu0 0.0
        %965 = vmatprep.subr.mxu0 0.0
        %966 = vmatpush1.msra.mxu0 0.0
        %967 = vmatprep.subr.mxu0 0.0
        %968 = vmatpush1.msra.mxu0 0.0
        %969 = vmatprep.subr.mxu0 0.0
        %970 = vmatpush1.msra.mxu0 0.0
        %971 = vmatprep.subr.mxu0 0.0
        %972 = vmatpush1.msra.mxu0 0.0
        %973 = vmatprep.subr.mxu0 0.0
        %974 = vmatpush1.msra.mxu0 0.0
        %975 = vmatprep.subr.mxu0 0.0
        %976 = vmatpush1.msra.mxu0 0.0
        %977 = vmatprep.subr.mxu0 0.0
        %978 = vmatpush1.msra.mxu0 0.0
        %979 = vmatprep.subr.mxu0 0.0
        %980 = vmatpush1.msra.mxu0 0.0
        %981 = vmatprep.subr.mxu0 0.0
        %982 = vmatpush1.msra.mxu0 0.0
        %983 = vmatprep.subr.mxu0 0.0
        %984 = vmatpush1.msra.mxu0 0.0
        %985 = vmatprep.subr.mxu0 0.0
        %986 = vmatpush1.msra.mxu0 0.0
        %987 = vmatprep.mubr.f32.mxu0 0.0
        %v988 = vand.u32 %v330, 4294901760
        %v989 = vsub.f32 %v330, %v988
        %990 = vmatmul.mubr.f32.gmra.mrb[0].mxu0 %v989
        %v991 = vpop.f32.mrb[0].mxu0
        %v992 = vadd.f32 %v782, %v991
        %v993 = vpop.f32.mrb[0].mxu0
        %v994 = vadd.f32 %v784, %v993
        %995 = vmatprep.mubr.f32.mxu0 0.0
        %v996 = vand.u32 %v333, 4294901760
        %v997 = vsub.f32 %v333, %v996
        %998 = vmatmul.mubr.f32.gmra.mrb[0].mxu0 %v997
        %v999 = vpop.f32.mrb[0].mxu0
        %v1000 = vadd.f32 %v789, %v999
        %v1001 = vpop.f32.mrb[0].mxu0
        %v1002 = vadd.f32 %v791, %v1001
        %1003 = vmatprep.mubr.f32.mxu0 0.0
        %v1004 = vand.u32 %v336, 4294901760
        %v1005 = vsub.f32 %v336, %v1004
        %1006 = vmatmul.mubr.f32.gmra.mrb[0].mxu0 %v1005
        %v1007 = vpop.f32.mrb[0].mxu0
        %v1008 = vadd.f32 %v796, %v1007
        %v1009 = vpop.f32.mrb[0].mxu0
        %v1010 = vadd.f32 %v798, %v1009
        %1011 = vmatprep.mubr.f32.mxu0 0.0
        %v1012 = vand.u32 %v339, 4294901760
        %v1013 = vsub.f32 %v339, %v1012
        %1014 = vmatmul.mubr.f32.gmra.mrb[0].mxu0 %v1013
        %v1015 = vpop.f32.mrb[0].mxu0
        %v1016 = vadd.f32 %v803, %v1015
        %v1017 = vpop.f32.mrb[0].mxu0
        %v1018 = vadd.f32 %v805, %v1017
        %1019 = vmatprep.mubr.f32.mxu0 0.0
        %v1020 = vand.u32 %v342, 4294901760
        %v1021 = vsub.f32 %v342, %v1020
        %1022 = vmatmul.mubr.f32.gmra.mrb[0].mxu0 %v1021
        %v1023 = vpop.f32.mrb[0].mxu0
        %v1024 = vadd.f32 %v810, %v1023
        %v1025 = vpop.f32.mrb[0].mxu0
        %v1026 = vadd.f32 %v812, %v1025
        %1027 = vmatprep.mubr.f32.mxu0 0.0
        %v1028 = vand.u32 %v345, 4294901760
        %v1029 = vsub.f32 %v345, %v1028
        %1030 = vmatmul.mubr.f32.gmra.mrb[0].mxu0 %v1029
        %v1031 = vpop.f32.mrb[0].mxu0
        %v1032 = vadd.f32 %v817, %v1031
        %v1033 = vpop.f32.mrb[0].mxu0
        %v1034 = vadd.f32 %v819, %v1033
        %1035 = vmatprep.mubr.f32.mxu0 0.0
        %v1036 = vand.u32 %v348, 4294901760
        %v1037 = vsub.f32 %v348, %v1036
        %1038 = vmatmul.mubr.f32.gmra.mrb[0].mxu0 %v1037
        %v1039 = vpop.f32.mrb[0].mxu0
        %v1040 = vadd.f32 %v824, %v1039
        %v1041 = vpop.f32.mrb[0].mxu0
        %v1042 = vadd.f32 %v826, %v1041
        %1043 = vmatprep.mubr.f32.mxu0 0.0
        %v1044 = vand.u32 %v351, 4294901760
        %v1045 = vsub.f32 %v351, %v1044
        %1046 = vmatmul.mubr.f32.gmra.mrb[0].mxu0 %v1045
        %v1047 = vpop.f32.mrb[0].mxu0
        %v1048 = vadd.f32 %v831, %v1047
        %v1049 = vpop.f32.mrb[0].mxu0
        %v1050 = vadd.f32 %v833, %v1049
        %1051 = vmatprep.mubr.f32.mxu0 0.0
        %v1052 = vand.u32 %v354, 4294901760
        %v1053 = vsub.f32 %v354, %v1052
        %1054 = vmatmul.mubr.f32.gmra.mrb[0].mxu0 %v1053
        %v1055 = vpop.f32.mrb[0].mxu0
        %v1056 = vadd.f32 %v838, %v1055
        %v1057 = vpop.f32.mrb[0].mxu0
        %v1058 = vadd.f32 %v840, %v1057
        %1059 = vmatprep.mubr.f32.mxu0 0.0
        %v1060 = vand.u32 %v357, 4294901760
        %v1061 = vsub.f32 %v357, %v1060
        %1062 = vmatmul.mubr.f32.gmra.mrb[0].mxu0 %v1061
        %v1063 = vpop.f32.mrb[0].mxu0
        %v1064 = vadd.f32 %v845, %v1063
        %v1065 = vpop.f32.mrb[0].mxu0
        %v1066 = vadd.f32 %v847, %v1065
        %1067 = vmatprep.mubr.f32.mxu0 0.0
        %v1068 = vand.u32 %v360, 4294901760
        %v1069 = vsub.f32 %v360, %v1068
        %1070 = vmatmul.mubr.f32.gmra.mrb[0].mxu0 %v1069
        %v1071 = vpop.f32.mrb[0].mxu0
        %v1072 = vadd.f32 %v852, %v1071
        %v1073 = vpop.f32.mrb[0].mxu0
        %v1074 = vadd.f32 %v854, %v1073
        %1075 = vmatprep.mubr.f32.mxu0 0.0
        %v1076 = vand.u32 %v363, 4294901760
        %v1077 = vsub.f32 %v363, %v1076
        %1078 = vmatmul.mubr.f32.gmra.mrb[0].mxu0 %v1077
        %v1079 = vpop.f32.mrb[0].mxu0
        %v1080 = vadd.f32 %v859, %v1079
        %v1081 = vpop.f32.mrb[0].mxu0
        %v1082 = vadd.f32 %v861, %v1081
        %1083 = vmatprep.mubr.f32.mxu0 0.0
        %v1084 = vand.u32 %v366, 4294901760
        %v1085 = vsub.f32 %v366, %v1084
        %1086 = vmatmul.mubr.f32.gmra.mrb[0].mxu0 %v1085
        %v1087 = vpop.f32.mrb[0].mxu0
        %v1088 = vadd.f32 %v866, %v1087
        %v1089 = vpop.f32.mrb[0].mxu0
        %v1090 = vadd.f32 %v868, %v1089
        %1091 = vmatprep.mubr.f32.mxu0 0.0
        %v1092 = vand.u32 %v369, 4294901760
        %v1093 = vsub.f32 %v369, %v1092
        %1094 = vmatmul.mubr.f32.gmra.mrb[0].mxu0 %v1093
        %v1095 = vpop.f32.mrb[0].mxu0
        %v1096 = vadd.f32 %v873, %v1095
        %v1097 = vpop.f32.mrb[0].mxu0
        %v1098 = vadd.f32 %v875, %v1097
        %1099 = vmatprep.mubr.f32.mxu0 0.0
        %v1100 = vand.u32 %v372, 4294901760
        %v1101 = vsub.f32 %v372, %v1100
        %1102 = vmatmul.mubr.f32.gmra.mrb[0].mxu0 %v1101
        %v1103 = vpop.f32.mrb[0].mxu0
        %v1104 = vadd.f32 %v880, %v1103
        %v1105 = vpop.f32.mrb[0].mxu0
        %v1106 = vadd.f32 %v882, %v1105
        %1107 = vmatprep.mubr.f32.mxu0 0.0
        %v1108 = vand.u32 %v375, 4294901760
        %v1109 = vsub.f32 %v375, %v1108
        %1110 = vmatmul.mubr.f32.gmra.mrb[0].mxu0 %v1109
        %v1111 = vpop.f32.mrb[0].mxu0
        %v1112 = vadd.f32 %v887, %v1111
        %v1113 = vpop.f32.mrb[0].mxu0
        %v1114 = vadd.f32 %v889, %v1113
        %1115 = vdwg.mxu0
        %v1116 = vand.u32 %v201, 4294901760
        %1117 = vmatprep.subr.mxu0 %v1116
        %v1118 = vand.u32 %v200, 4294901760
        %1119 = vmatpush1.msra.mxu0 %v1118
        %v1120 = vand.u32 %v203, 4294901760
        %1121 = vmatprep.subr.mxu0 %v1120
        %v1122 = vand.u32 %v202, 4294901760
        %1123 = vmatpush1.msra.mxu0 %v1122
        %v1124 = vand.u32 %v205, 4294901760
        %1125 = vmatprep.subr.mxu0 %v1124
        %v1126 = vand.u32 %v204, 4294901760
        %1127 = vmatpush1.msra.mxu0 %v1126
        %v1128 = vand.u32 %v207, 4294901760
        %1129 = vmatprep.subr.mxu0 %v1128
        %v1130 = vand.u32 %v206, 4294901760
        %1131 = vmatpush1.msra.mxu0 %v1130
        %v1132 = vand.u32 %v209, 4294901760
        %1133 = vmatprep.subr.mxu0 %v1132
        %v1134 = vand.u32 %v208, 4294901760
        %1135 = vmatpush1.msra.mxu0 %v1134
        %v1136 = vand.u32 %v211, 4294901760
        %1137 = vmatprep.subr.mxu0 %v1136
        %v1138 = vand.u32 %v210, 4294901760
        %1139 = vmatpush1.msra.mxu0 %v1138
        %v1140 = vand.u32 %v213, 4294901760
        %1141 = vmatprep.subr.mxu0 %v1140
        %v1142 = vand.u32 %v212, 4294901760
        %1143 = vmatpush1.msra.mxu0 %v1142
        %v1144 = vand.u32 %v215, 4294901760
        %1145 = vmatprep.subr.mxu0 %v1144
        %v1146 = vand.u32 %v214, 4294901760
        %1147 = vmatpush1.msra.mxu0 %v1146
        %1148 = vmatprep.subr.mxu0 0.0
        %1149 = vmatpush1.msra.mxu0 0.0
        %1150 = vmatprep.subr.mxu0 0.0
        %1151 = vmatpush1.msra.mxu0 0.0
        %1152 = vmatprep.subr.mxu0 0.0
        %1153 = vmatpush1.msra.mxu0 0.0
        %1154 = vmatprep.subr.mxu0 0.0
        %1155 = vmatpush1.msra.mxu0 0.0
        %1156 = vmatprep.subr.mxu0 0.0
        %1157 = vmatpush1.msra.mxu0 0.0
        %1158 = vmatprep.subr.mxu0 0.0
        %1159 = vmatpush1.msra.mxu0 0.0
        %1160 = vmatprep.subr.mxu0 0.0
        %1161 = vmatpush1.msra.mxu0 0.0
        %1162 = vmatprep.subr.mxu0 0.0
        %1163 = vmatpush1.msra.mxu0 0.0
        %1164 = vmatprep.subr.mxu0 0.0
        %1165 = vmatpush1.msra.mxu0 0.0
        %1166 = vmatprep.subr.mxu0 0.0
        %1167 = vmatpush1.msra.mxu0 0.0
        %1168 = vmatprep.subr.mxu0 0.0
        %1169 = vmatpush1.msra.mxu0 0.0
        %1170 = vmatprep.subr.mxu0 0.0
        %1171 = vmatpush1.msra.mxu0 0.0
        %1172 = vmatprep.subr.mxu0 0.0
        %1173 = vmatpush1.msra.mxu0 0.0
        %1174 = vmatprep.subr.mxu0 0.0
        %1175 = vmatpush1.msra.mxu0 0.0
        %1176 = vmatprep.subr.mxu0 0.0
        %1177 = vmatpush1.msra.mxu0 0.0
        %1178 = vmatprep.subr.mxu0 0.0
        %1179 = vmatpush1.msra.mxu0 0.0
        %1180 = vmatprep.subr.mxu0 0.0
        %1181 = vmatpush1.msra.mxu0 0.0
        %1182 = vmatprep.subr.mxu0 0.0
        %1183 = vmatpush1.msra.mxu0 0.0
        %1184 = vmatprep.subr.mxu0 0.0
        %1185 = vmatpush1.msra.mxu0 0.0
        %1186 = vmatprep.subr.mxu0 0.0
        %1187 = vmatpush1.msra.mxu0 0.0
        %1188 = vmatprep.subr.mxu0 0.0
        %1189 = vmatpush1.msra.mxu0 0.0
        %1190 = vmatprep.subr.mxu0 0.0
        %1191 = vmatpush1.msra.mxu0 0.0
        %1192 = vmatprep.subr.mxu0 0.0
        %1193 = vmatpush1.msra.mxu0 0.0
        %1194 = vmatprep.subr.mxu0 0.0
        %1195 = vmatpush1.msra.mxu0 0.0
        %1196 = vmatprep.mubr.f32.mxu0 0.0
        %v1197 = vand.u32 %v330, 4294901760
        %v1198 = vsub.f32 %v330, %v1197
        %v1199 = vand.u32 %v1198, 4294901760
        %1200 = vmatmul.mubr.f32.gmra.mrb[0].mxu0 %v1199
        %v1201 = vpop.f32.mrb[0].mxu0
        %v1202 = vadd.f32 %v992, %v1201
        %v1203 = vpop.f32.mrb[0].mxu0
        %v1204 = vadd.f32 %v994, %v1203
        %1205 = vmatprep.mubr.f32.mxu0 0.0
        %v1206 = vand.u32 %v333, 4294901760
        %v1207 = vsub.f32 %v333, %v1206
        %v1208 = vand.u32 %v1207, 4294901760
        %1209 = vmatmul.mubr.f32.gmra.mrb[0].mxu0 %v1208
        %v1210 = vpop.f32.mrb[0].mxu0
        %v1211 = vadd.f32 %v1000, %v1210
        %v1212 = vpop.f32.mrb[0].mxu0
        %v1213 = vadd.f32 %v1002, %v1212
        %1214 = vmatprep.mubr.f32.mxu0 0.0
        %v1215 = vand.u32 %v336, 4294901760
        %v1216 = vsub.f32 %v336, %v1215
        %v1217 = vand.u32 %v1216, 4294901760
        %1218 = vmatmul.mubr.f32.gmra.mrb[0].mxu0 %v1217
        %v1219 = vpop.f32.mrb[0].mxu0
        %v1220 = vadd.f32 %v1008, %v1219
        %v1221 = vpop.f32.mrb[0].mxu0
        %v1222 = vadd.f32 %v1010, %v1221
        %1223 = vmatprep.mubr.f32.mxu0 0.0
        %v1224 = vand.u32 %v339, 4294901760
        %v1225 = vsub.f32 %v339, %v1224
        %v1226 = vand.u32 %v1225, 4294901760
        %1227 = vmatmul.mubr.f32.gmra.mrb[0].mxu0 %v1226
        %v1228 = vpop.f32.mrb[0].mxu0
        %v1229 = vadd.f32 %v1016, %v1228
        %v1230 = vpop.f32.mrb[0].mxu0
        %v1231 = vadd.f32 %v1018, %v1230
        %1232 = vmatprep.mubr.f32.mxu0 0.0
        %v1233 = vand.u32 %v342, 4294901760
        %v1234 = vsub.f32 %v342, %v1233
        %v1235 = vand.u32 %v1234, 4294901760
        %1236 = vmatmul.mubr.f32.gmra.mrb[0].mxu0 %v1235
        %v1237 = vpop.f32.mrb[0].mxu0
        %v1238 = vadd.f32 %v1024, %v1237
        %v1239 = vpop.f32.mrb[0].mxu0
        %v1240 = vadd.f32 %v1026, %v1239
        %1241 = vmatprep.mubr.f32.mxu0 0.0
        %v1242 = vand.u32 %v345, 4294901760
        %v1243 = vsub.f32 %v345, %v1242
        %v1244 = vand.u32 %v1243, 4294901760
        %1245 = vmatmul.mubr.f32.gmra.mrb[0].mxu0 %v1244
        %v1246 = vpop.f32.mrb[0].mxu0
        %v1247 = vadd.f32 %v1032, %v1246
        %v1248 = vpop.f32.mrb[0].mxu0
        %v1249 = vadd.f32 %v1034, %v1248
        %1250 = vmatprep.mubr.f32.mxu0 0.0
        %v1251 = vand.u32 %v348, 4294901760
        %v1252 = vsub.f32 %v348, %v1251
        %v1253 = vand.u32 %v1252, 4294901760
        %1254 = vmatmul.mubr.f32.gmra.mrb[0].mxu0 %v1253
        %v1255 = vpop.f32.mrb[0].mxu0
        %v1256 = vadd.f32 %v1040, %v1255
        %v1257 = vpop.f32.mrb[0].mxu0
        %v1258 = vadd.f32 %v1042, %v1257
        %1259 = vmatprep.mubr.f32.mxu0 0.0
        %v1260 = vand.u32 %v351, 4294901760
        %v1261 = vsub.f32 %v351, %v1260
        %v1262 = vand.u32 %v1261, 4294901760
        %1263 = vmatmul.mubr.f32.gmra.mrb[0].mxu0 %v1262
        %v1264 = vpop.f32.mrb[0].mxu0
        %v1265 = vadd.f32 %v1048, %v1264
        %v1266 = vpop.f32.mrb[0].mxu0
        %v1267 = vadd.f32 %v1050, %v1266
        %1268 = vmatprep.mubr.f32.mxu0 0.0
        %v1269 = vand.u32 %v354, 4294901760
        %v1270 = vsub.f32 %v354, %v1269
        %v1271 = vand.u32 %v1270, 4294901760
        %1272 = vmatmul.mubr.f32.gmra.mrb[0].mxu0 %v1271
        %v1273 = vpop.f32.mrb[0].mxu0
        %v1274 = vadd.f32 %v1056, %v1273
        %v1275 = vpop.f32.mrb[0].mxu0
        %v1276 = vadd.f32 %v1058, %v1275
        %1277 = vmatprep.mubr.f32.mxu0 0.0
        %v1278 = vand.u32 %v357, 4294901760
        %v1279 = vsub.f32 %v357, %v1278
        %v1280 = vand.u32 %v1279, 4294901760
        %1281 = vmatmul.mubr.f32.gmra.mrb[0].mxu0 %v1280
        %v1282 = vpop.f32.mrb[0].mxu0
        %v1283 = vadd.f32 %v1064, %v1282
        %v1284 = vpop.f32.mrb[0].mxu0
        %v1285 = vadd.f32 %v1066, %v1284
        %1286 = vmatprep.mubr.f32.mxu0 0.0
        %v1287 = vand.u32 %v360, 4294901760
        %v1288 = vsub.f32 %v360, %v1287
        %v1289 = vand.u32 %v1288, 4294901760
        %1290 = vmatmul.mubr.f32.gmra.mrb[0].mxu0 %v1289
        %v1291 = vpop.f32.mrb[0].mxu0
        %v1292 = vadd.f32 %v1072, %v1291
        %v1293 = vpop.f32.mrb[0].mxu0
        %v1294 = vadd.f32 %v1074, %v1293
        %1295 = vmatprep.mubr.f32.mxu0 0.0
        %v1296 = vand.u32 %v363, 4294901760
        %v1297 = vsub.f32 %v363, %v1296
        %v1298 = vand.u32 %v1297, 4294901760
        %1299 = vmatmul.mubr.f32.gmra.mrb[0].mxu0 %v1298
        %v1300 = vpop.f32.mrb[0].mxu0
        %v1301 = vadd.f32 %v1080, %v1300
        %v1302 = vpop.f32.mrb[0].mxu0
        %v1303 = vadd.f32 %v1082, %v1302
        %1304 = vmatprep.mubr.f32.mxu0 0.0
        %v1305 = vand.u32 %v366, 4294901760
        %v1306 = vsub.f32 %v366, %v1305
        %v1307 = vand.u32 %v1306, 4294901760
        %1308 = vmatmul.mubr.f32.gmra.mrb[0].mxu0 %v1307
        %v1309 = vpop.f32.mrb[0].mxu0
        %v1310 = vadd.f32 %v1088, %v1309
        %v1311 = vpop.f32.mrb[0].mxu0
        %v1312 = vadd.f32 %v1090, %v1311
        %1313 = vmatprep.mubr.f32.mxu0 0.0
        %v1314 = vand.u32 %v369, 4294901760
        %v1315 = vsub.f32 %v369, %v1314
        %v1316 = vand.u32 %v1315, 4294901760
        %1317 = vmatmul.mubr.f32.gmra.mrb[0].mxu0 %v1316
        %v1318 = vpop.f32.mrb[0].mxu0
        %v1319 = vadd.f32 %v1096, %v1318
        %v1320 = vpop.f32.mrb[0].mxu0
        %v1321 = vadd.f32 %v1098, %v1320
        %1322 = vmatprep.mubr.f32.mxu0 0.0
        %v1323 = vand.u32 %v372, 4294901760
        %v1324 = vsub.f32 %v372, %v1323
        %v1325 = vand.u32 %v1324, 4294901760
        %1326 = vmatmul.mubr.f32.gmra.mrb[0].mxu0 %v1325
        %v1327 = vpop.f32.mrb[0].mxu0
        %v1328 = vadd.f32 %v1104, %v1327
        %v1329 = vpop.f32.mrb[0].mxu0
        %v1330 = vadd.f32 %v1106, %v1329
        %1331 = vmatprep.mubr.f32.mxu0 0.0
        %v1332 = vand.u32 %v375, 4294901760
        %v1333 = vsub.f32 %v375, %v1332
        %v1334 = vand.u32 %v1333, 4294901760
        %1335 = vmatmul.mubr.f32.gmra.mrb[0].mxu0 %v1334
        %v1336 = vpop.f32.mrb[0].mxu0
        %v1337 = vadd.f32 %v1112, %v1336
        %v1338 = vpop.f32.mrb[0].mxu0
        %v1339 = vadd.f32 %v1114, %v1338
        %1340 = vdwg.mxu0
        %v1341 = vand.u32 %v201, 4294901760
        %v1342 = vsub.f32 %v201, %v1341
        %v1343 = vand.u32 %v1342, 4294901760
        %1344 = vmatprep.subr.mxu0 %v1343
        %v1345 = vand.u32 %v200, 4294901760
        %v1346 = vsub.f32 %v200, %v1345
        %v1347 = vand.u32 %v1346, 4294901760
        %1348 = vmatpush1.msra.mxu0 %v1347
        %v1349 = vand.u32 %v203, 4294901760
        %v1350 = vsub.f32 %v203, %v1349
        %v1351 = vand.u32 %v1350, 4294901760
        %1352 = vmatprep.subr.mxu0 %v1351
        %v1353 = vand.u32 %v202, 4294901760
        %v1354 = vsub.f32 %v202, %v1353
        %v1355 = vand.u32 %v1354, 4294901760
        %1356 = vmatpush1.msra.mxu0 %v1355
        %v1357 = vand.u32 %v205, 4294901760
        %v1358 = vsub.f32 %v205, %v1357
        %v1359 = vand.u32 %v1358, 4294901760
        %1360 = vmatprep.subr.mxu0 %v1359
        %v1361 = vand.u32 %v204, 4294901760
        %v1362 = vsub.f32 %v204, %v1361
        %v1363 = vand.u32 %v1362, 4294901760
        %1364 = vmatpush1.msra.mxu0 %v1363
        %v1365 = vand.u32 %v207, 4294901760
        %v1366 = vsub.f32 %v207, %v1365
        %v1367 = vand.u32 %v1366, 4294901760
        %1368 = vmatprep.subr.mxu0 %v1367
        %v1369 = vand.u32 %v206, 4294901760
        %v1370 = vsub.f32 %v206, %v1369
        %v1371 = vand.u32 %v1370, 4294901760
        %1372 = vmatpush1.msra.mxu0 %v1371
        %v1373 = vand.u32 %v209, 4294901760
        %v1374 = vsub.f32 %v209, %v1373
        %v1375 = vand.u32 %v1374, 4294901760
        %1376 = vmatprep.subr.mxu0 %v1375
        %v1377 = vand.u32 %v208, 4294901760
        %v1378 = vsub.f32 %v208, %v1377
        %v1379 = vand.u32 %v1378, 4294901760
        %1380 = vmatpush1.msra.mxu0 %v1379
        %v1381 = vand.u32 %v211, 4294901760
        %v1382 = vsub.f32 %v211, %v1381
        %v1383 = vand.u32 %v1382, 4294901760
        %1384 = vmatprep.subr.mxu0 %v1383
        %v1385 = vand.u32 %v210, 4294901760
        %v1386 = vsub.f32 %v210, %v1385
        %v1387 = vand.u32 %v1386, 4294901760
        %1388 = vmatpush1.msra.mxu0 %v1387
        %v1389 = vand.u32 %v213, 4294901760
        %v1390 = vsub.f32 %v213, %v1389
        %v1391 = vand.u32 %v1390, 4294901760
        %1392 = vmatprep.subr.mxu0 %v1391
        %v1393 = vand.u32 %v212, 4294901760
        %v1394 = vsub.f32 %v212, %v1393
        %v1395 = vand.u32 %v1394, 4294901760
        %1396 = vmatpush1.msra.mxu0 %v1395
        %v1397 = vand.u32 %v215, 4294901760
        %v1398 = vsub.f32 %v215, %v1397
        %v1399 = vand.u32 %v1398, 4294901760
        %1400 = vmatprep.subr.mxu0 %v1399
        %v1401 = vand.u32 %v214, 4294901760
        %v1402 = vsub.f32 %v214, %v1401
        %v1403 = vand.u32 %v1402, 4294901760
        %1404 = vmatpush1.msra.mxu0 %v1403
        %1405 = vmatprep.subr.mxu0 0.0
        %1406 = vmatpush1.msra.mxu0 0.0
        %1407 = vmatprep.subr.mxu0 0.0
        %1408 = vmatpush1.msra.mxu0 0.0
        %1409 = vmatprep.subr.mxu0 0.0
        %1410 = vmatpush1.msra.mxu0 0.0
        %1411 = vmatprep.subr.mxu0 0.0
        %1412 = vmatpush1.msra.mxu0 0.0
        %1413 = vmatprep.subr.mxu0 0.0
        %1414 = vmatpush1.msra.mxu0 0.0
        %1415 = vmatprep.subr.mxu0 0.0
        %1416 = vmatpush1.msra.mxu0 0.0
        %1417 = vmatprep.subr.mxu0 0.0
        %1418 = vmatpush1.msra.mxu0 0.0
        %1419 = vmatprep.subr.mxu0 0.0
        %1420 = vmatpush1.msra.mxu0 0.0
        %1421 = vmatprep.subr.mxu0 0.0
        %1422 = vmatpush1.msra.mxu0 0.0
        %1423 = vmatprep.subr.mxu0 0.0
        %1424 = vmatpush1.msra.mxu0 0.0
        %1425 = vmatprep.subr.mxu0 0.0
        %1426 = vmatpush1.msra.mxu0 0.0
        %1427 = vmatprep.subr.mxu0 0.0
        %1428 = vmatpush1.msra.mxu0 0.0
        %1429 = vmatprep.subr.mxu0 0.0
        %1430 = vmatpush1.msra.mxu0 0.0
        %1431 = vmatprep.subr.mxu0 0.0
        %1432 = vmatpush1.msra.mxu0 0.0
        %1433 = vmatprep.subr.mxu0 0.0
        %1434 = vmatpush1.msra.mxu0 0.0
        %1435 = vmatprep.subr.mxu0 0.0
        %1436 = vmatpush1.msra.mxu0 0.0
        %1437 = vmatprep.subr.mxu0 0.0
        %1438 = vmatpush1.msra.mxu0 0.0
        %1439 = vmatprep.subr.mxu0 0.0
        %1440 = vmatpush1.msra.mxu0 0.0
        %1441 = vmatprep.subr.mxu0 0.0
        %1442 = vmatpush1.msra.mxu0 0.0
        %1443 = vmatprep.subr.mxu0 0.0
        %1444 = vmatpush1.msra.mxu0 0.0
        %1445 = vmatprep.subr.mxu0 0.0
        %1446 = vmatpush1.msra.mxu0 0.0
        %1447 = vmatprep.subr.mxu0 0.0
        %1448 = vmatpush1.msra.mxu0 0.0
        %1449 = vmatprep.subr.mxu0 0.0
        %1450 = vmatpush1.msra.mxu0 0.0
        %1451 = vmatprep.subr.mxu0 0.0
        %1452 = vmatpush1.msra.mxu0 0.0
        %1453 = vmatprep.mubr.f32.mxu0 0.0
        %v1454 = vand.u32 %v330, 4294901760
        %1455 = vmatmul.mubr.f32.gmra.mrb[0].mxu0 %v1454
        %v1456 = vpop.f32.mrb[0].mxu0
        %v1457 = vadd.f32 %v1202, %v1456
        %v1458 = vpop.f32.mrb[0].mxu0
        %v1459 = vadd.f32 %v1204, %v1458
        %1460 = vmatprep.mubr.f32.mxu0 0.0
        %v1461 = vand.u32 %v333, 4294901760
        %1462 = vmatmul.mubr.f32.gmra.mrb[0].mxu0 %v1461
        %v1463 = vpop.f32.mrb[0].mxu0
        %v1464 = vadd.f32 %v1211, %v1463
        %v1465 = vpop.f32.mrb[0].mxu0
        %v1466 = vadd.f32 %v1213, %v1465
        %1467 = vmatprep.mubr.f32.mxu0 0.0
        %v1468 = vand.u32 %v336, 4294901760
        %1469 = vmatmul.mubr.f32.gmra.mrb[0].mxu0 %v1468
        %v1470 = vpop.f32.mrb[0].mxu0
        %v1471 = vadd.f32 %v1220, %v1470
        %v1472 = vpop.f32.mrb[0].mxu0
        %v1473 = vadd.f32 %v1222, %v1472
        %1474 = vmatprep.mubr.f32.mxu0 0.0
        %v1475 = vand.u32 %v339, 4294901760
        %1476 = vmatmul.mubr.f32.gmra.mrb[0].mxu0 %v1475
        %v1477 = vpop.f32.mrb[0].mxu0
        %v1478 = vadd.f32 %v1229, %v1477
        %v1479 = vpop.f32.mrb[0].mxu0
        %v1480 = vadd.f32 %v1231, %v1479
        %1481 = vmatprep.mubr.f32.mxu0 0.0
        %v1482 = vand.u32 %v342, 4294901760
        %1483 = vmatmul.mubr.f32.gmra.mrb[0].mxu0 %v1482
        %v1484 = vpop.f32.mrb[0].mxu0
        %v1485 = vadd.f32 %v1238, %v1484
        %v1486 = vpop.f32.mrb[0].mxu0
        %v1487 = vadd.f32 %v1240, %v1486
        %1488 = vmatprep.mubr.f32.mxu0 0.0
        %v1489 = vand.u32 %v345, 4294901760
        %1490 = vmatmul.mubr.f32.gmra.mrb[0].mxu0 %v1489
        %v1491 = vpop.f32.mrb[0].mxu0
        %v1492 = vadd.f32 %v1247, %v1491
        %v1493 = vpop.f32.mrb[0].mxu0
        %v1494 = vadd.f32 %v1249, %v1493
        %1495 = vmatprep.mubr.f32.mxu0 0.0
        %v1496 = vand.u32 %v348, 4294901760
        %1497 = vmatmul.mubr.f32.gmra.mrb[0].mxu0 %v1496
        %v1498 = vpop.f32.mrb[0].mxu0
        %v1499 = vadd.f32 %v1256, %v1498
        %v1500 = vpop.f32.mrb[0].mxu0
        %v1501 = vadd.f32 %v1258, %v1500
        %1502 = vmatprep.mubr.f32.mxu0 0.0
        %v1503 = vand.u32 %v351, 4294901760
        %1504 = vmatmul.mubr.f32.gmra.mrb[0].mxu0 %v1503
        %v1505 = vpop.f32.mrb[0].mxu0
        %v1506 = vadd.f32 %v1265, %v1505
        %v1507 = vpop.f32.mrb[0].mxu0
        %v1508 = vadd.f32 %v1267, %v1507
        %1509 = vmatprep.mubr.f32.mxu0 0.0
        %v1510 = vand.u32 %v354, 4294901760
        %1511 = vmatmul.mubr.f32.gmra.mrb[0].mxu0 %v1510
        %v1512 = vpop.f32.mrb[0].mxu0
        %v1513 = vadd.f32 %v1274, %v1512
        %v1514 = vpop.f32.mrb[0].mxu0
        %v1515 = vadd.f32 %v1276, %v1514
        %1516 = vmatprep.mubr.f32.mxu0 0.0
        %v1517 = vand.u32 %v357, 4294901760
        %1518 = vmatmul.mubr.f32.gmra.mrb[0].mxu0 %v1517
        %v1519 = vpop.f32.mrb[0].mxu0
        %v1520 = vadd.f32 %v1283, %v1519
        %v1521 = vpop.f32.mrb[0].mxu0
        %v1522 = vadd.f32 %v1285, %v1521
        %1523 = vmatprep.mubr.f32.mxu0 0.0
        %v1524 = vand.u32 %v360, 4294901760
        %1525 = vmatmul.mubr.f32.gmra.mrb[0].mxu0 %v1524
        %v1526 = vpop.f32.mrb[0].mxu0
        %v1527 = vadd.f32 %v1292, %v1526
        %v1528 = vpop.f32.mrb[0].mxu0
        %v1529 = vadd.f32 %v1294, %v1528
        %1530 = vmatprep.mubr.f32.mxu0 0.0
        %v1531 = vand.u32 %v363, 4294901760
        %1532 = vmatmul.mubr.f32.gmra.mrb[0].mxu0 %v1531
        %v1533 = vpop.f32.mrb[0].mxu0
        %v1534 = vadd.f32 %v1301, %v1533
        %v1535 = vpop.f32.mrb[0].mxu0
        %v1536 = vadd.f32 %v1303, %v1535
        %1537 = vmatprep.mubr.f32.mxu0 0.0
        %v1538 = vand.u32 %v366, 4294901760
        %1539 = vmatmul.mubr.f32.gmra.mrb[0].mxu0 %v1538
        %v1540 = vpop.f32.mrb[0].mxu0
        %v1541 = vadd.f32 %v1310, %v1540
        %v1542 = vpop.f32.mrb[0].mxu0
        %v1543 = vadd.f32 %v1312, %v1542
        %1544 = vmatprep.mubr.f32.mxu0 0.0
        %v1545 = vand.u32 %v369, 4294901760
        %1546 = vmatmul.mubr.f32.gmra.mrb[0].mxu0 %v1545
        %v1547 = vpop.f32.mrb[0].mxu0
        %v1548 = vadd.f32 %v1319, %v1547
        %v1549 = vpop.f32.mrb[0].mxu0
        %v1550 = vadd.f32 %v1321, %v1549
        %1551 = vmatprep.mubr.f32.mxu0 0.0
        %v1552 = vand.u32 %v372, 4294901760
        %1553 = vmatmul.mubr.f32.gmra.mrb[0].mxu0 %v1552
        %v1554 = vpop.f32.mrb[0].mxu0
        %v1555 = vadd.f32 %v1328, %v1554
        %v1556 = vpop.f32.mrb[0].mxu0
        %v1557 = vadd.f32 %v1330, %v1556
        %1558 = vmatprep.mubr.f32.mxu0 0.0
        %v1559 = vand.u32 %v375, 4294901760
        %1560 = vmatmul.mubr.f32.gmra.mrb[0].mxu0 %v1559
        %v1561 = vpop.f32.mrb[0].mxu0
        %v1562 = vadd.f32 %v1337, %v1561
        %v1563 = vpop.f32.mrb[0].mxu0
        %v1564 = vadd.f32 %v1339, %v1563
        %1565 = vdwg.mxu0
        %v1566 = vand.u32 %v201, 4294901760
        %1567 = vmatprep.subr.mxu0 %v1566
        %v1568 = vand.u32 %v200, 4294901760
        %1569 = vmatpush1.msra.mxu0 %v1568
        %v1570 = vand.u32 %v203, 4294901760
        %1571 = vmatprep.subr.mxu0 %v1570
        %v1572 = vand.u32 %v202, 4294901760
        %1573 = vmatpush1.msra.mxu0 %v1572
        %v1574 = vand.u32 %v205, 4294901760
        %1575 = vmatprep.subr.mxu0 %v1574
        %v1576 = vand.u32 %v204, 4294901760
        %1577 = vmatpush1.msra.mxu0 %v1576
        %v1578 = vand.u32 %v207, 4294901760
        %1579 = vmatprep.subr.mxu0 %v1578
        %v1580 = vand.u32 %v206, 4294901760
        %1581 = vmatpush1.msra.mxu0 %v1580
        %v1582 = vand.u32 %v209, 4294901760
        %1583 = vmatprep.subr.mxu0 %v1582
        %v1584 = vand.u32 %v208, 4294901760
        %1585 = vmatpush1.msra.mxu0 %v1584
        %v1586 = vand.u32 %v211, 4294901760
        %1587 = vmatprep.subr.mxu0 %v1586
        %v1588 = vand.u32 %v210, 4294901760
        %1589 = vmatpush1.msra.mxu0 %v1588
        %v1590 = vand.u32 %v213, 4294901760
        %1591 = vmatprep.subr.mxu0 %v1590
        %v1592 = vand.u32 %v212, 4294901760
        %1593 = vmatpush1.msra.mxu0 %v1592
        %v1594 = vand.u32 %v215, 4294901760
        %1595 = vmatprep.subr.mxu0 %v1594
        %v1596 = vand.u32 %v214, 4294901760
        %1597 = vmatpush1.msra.mxu0 %v1596
        %1598 = vmatprep.subr.mxu0 0.0
        %1599 = vmatpush1.msra.mxu0 0.0
        %1600 = vmatprep.subr.mxu0 0.0
        %1601 = vmatpush1.msra.mxu0 0.0
        %1602 = vmatprep.subr.mxu0 0.0
        %1603 = vmatpush1.msra.mxu0 0.0
        %1604 = vmatprep.subr.mxu0 0.0
        %1605 = vmatpush1.msra.mxu0 0.0
        %1606 = vmatprep.subr.mxu0 0.0
        %1607 = vmatpush1.msra.mxu0 0.0
        %1608 = vmatprep.subr.mxu0 0.0
        %1609 = vmatpush1.msra.mxu0 0.0
        %1610 = vmatprep.subr.mxu0 0.0
        %1611 = vmatpush1.msra.mxu0 0.0
        %1612 = vmatprep.subr.mxu0 0.0
        %1613 = vmatpush1.msra.mxu0 0.0
        %1614 = vmatprep.subr.mxu0 0.0
        %1615 = vmatpush1.msra.mxu0 0.0
        %1616 = vmatprep.subr.mxu0 0.0
        %1617 = vmatpush1.msra.mxu0 0.0
        %1618 = vmatprep.subr.mxu0 0.0
        %1619 = vmatpush1.msra.mxu0 0.0
        %1620 = vmatprep.subr.mxu0 0.0
        %1621 = vmatpush1.msra.mxu0 0.0
        %1622 = vmatprep.subr.mxu0 0.0
        %1623 = vmatpush1.msra.mxu0 0.0
        %1624 = vmatprep.subr.mxu0 0.0
        %1625 = vmatpush1.msra.mxu0 0.0
        %1626 = vmatprep.subr.mxu0 0.0
        %1627 = vmatpush1.msra.mxu0 0.0
        %1628 = vmatprep.subr.mxu0 0.0
        %1629 = vmatpush1.msra.mxu0 0.0
        %1630 = vmatprep.subr.mxu0 0.0
        %1631 = vmatpush1.msra.mxu0 0.0
        %1632 = vmatprep.subr.mxu0 0.0
        %1633 = vmatpush1.msra.mxu0 0.0
        %1634 = vmatprep.subr.mxu0 0.0
        %1635 = vmatpush1.msra.mxu0 0.0
        %1636 = vmatprep.subr.mxu0 0.0
        %1637 = vmatpush1.msra.mxu0 0.0
        %1638 = vmatprep.subr.mxu0 0.0
        %1639 = vmatpush1.msra.mxu0 0.0
        %1640 = vmatprep.subr.mxu0 0.0
        %1641 = vmatpush1.msra.mxu0 0.0
        %1642 = vmatprep.subr.mxu0 0.0
        %1643 = vmatpush1.msra.mxu0 0.0
        %1644 = vmatprep.subr.mxu0 0.0
        %1645 = vmatpush1.msra.mxu0 0.0
        %1646 = vmatprep.mubr.f32.mxu0 0.0
        %v1647 = vand.u32 %v330, 4294901760
        %1648 = vmatmul.mubr.f32.gmra.mrb[0].mxu0 %v1647
        %v1649 = vpop.f32.mrb[0].mxu0
        %v1650 = vadd.f32 %v1457, %v1649
        %v1651 = vpop.f32.mrb[0].mxu0
        %v1652 = vadd.f32 %v1459, %v1651
        %1653 = vmatprep.mubr.f32.mxu0 0.0
        %v1654 = vand.u32 %v333, 4294901760
        %1655 = vmatmul.mubr.f32.gmra.mrb[0].mxu0 %v1654
        %v1656 = vpop.f32.mrb[0].mxu0
        %v1657 = vadd.f32 %v1464, %v1656
        %v1658 = vpop.f32.mrb[0].mxu0
        %v1659 = vadd.f32 %v1466, %v1658
        %1660 = vmatprep.mubr.f32.mxu0 0.0
        %v1661 = vand.u32 %v336, 4294901760
        %1662 = vmatmul.mubr.f32.gmra.mrb[0].mxu0 %v1661
        %v1663 = vpop.f32.mrb[0].mxu0
        %v1664 = vadd.f32 %v1471, %v1663
        %v1665 = vpop.f32.mrb[0].mxu0
        %v1666 = vadd.f32 %v1473, %v1665
        %1667 = vmatprep.mubr.f32.mxu0 0.0
        %v1668 = vand.u32 %v339, 4294901760
        %1669 = vmatmul.mubr.f32.gmra.mrb[0].mxu0 %v1668
        %v1670 = vpop.f32.mrb[0].mxu0
        %v1671 = vadd.f32 %v1478, %v1670
        %v1672 = vpop.f32.mrb[0].mxu0
        %v1673 = vadd.f32 %v1480, %v1672
        %1674 = vmatprep.mubr.f32.mxu0 0.0
        %v1675 = vand.u32 %v342, 4294901760
        %1676 = vmatmul.mubr.f32.gmra.mrb[0].mxu0 %v1675
        %v1677 = vpop.f32.mrb[0].mxu0
        %v1678 = vadd.f32 %v1485, %v1677
        %v1679 = vpop.f32.mrb[0].mxu0
        %v1680 = vadd.f32 %v1487, %v1679
        %1681 = vmatprep.mubr.f32.mxu0 0.0
        %v1682 = vand.u32 %v345, 4294901760
        %1683 = vmatmul.mubr.f32.gmra.mrb[0].mxu0 %v1682
        %v1684 = vpop.f32.mrb[0].mxu0
        %v1685 = vadd.f32 %v1492, %v1684
        %v1686 = vpop.f32.mrb[0].mxu0
        %v1687 = vadd.f32 %v1494, %v1686
        %1688 = vmatprep.mubr.f32.mxu0 0.0
        %v1689 = vand.u32 %v348, 4294901760
        %1690 = vmatmul.mubr.f32.gmra.mrb[0].mxu0 %v1689
        %v1691 = vpop.f32.mrb[0].mxu0
        %v1692 = vadd.f32 %v1499, %v1691
        %v1693 = vpop.f32.mrb[0].mxu0
        %v1694 = vadd.f32 %v1501, %v1693
        %1695 = vmatprep.mubr.f32.mxu0 0.0
        %v1696 = vand.u32 %v351, 4294901760
        %1697 = vmatmul.mubr.f32.gmra.mrb[0].mxu0 %v1696
        %v1698 = vpop.f32.mrb[0].mxu0
        %v1699 = vadd.f32 %v1506, %v1698
        %v1700 = vpop.f32.mrb[0].mxu0
        %v1701 = vadd.f32 %v1508, %v1700
        %1702 = vmatprep.mubr.f32.mxu0 0.0
        %v1703 = vand.u32 %v354, 4294901760
        %1704 = vmatmul.mubr.f32.gmra.mrb[0].mxu0 %v1703
        %v1705 = vpop.f32.mrb[0].mxu0
        %v1706 = vadd.f32 %v1513, %v1705
        %v1707 = vpop.f32.mrb[0].mxu0
        %v1708 = vadd.f32 %v1515, %v1707
        %1709 = vmatprep.mubr.f32.mxu0 0.0
        %v1710 = vand.u32 %v357, 4294901760
        %1711 = vmatmul.mubr.f32.gmra.mrb[0].mxu0 %v1710
        %v1712 = vpop.f32.mrb[0].mxu0
        %v1713 = vadd.f32 %v1520, %v1712
        %v1714 = vpop.f32.mrb[0].mxu0
        %v1715 = vadd.f32 %v1522, %v1714
        %1716 = vmatprep.mubr.f32.mxu0 0.0
        %v1717 = vand.u32 %v360, 4294901760
        %1718 = vmatmul.mubr.f32.gmra.mrb[0].mxu0 %v1717
        %v1719 = vpop.f32.mrb[0].mxu0
        %v1720 = vadd.f32 %v1527, %v1719
        %v1721 = vpop.f32.mrb[0].mxu0
        %v1722 = vadd.f32 %v1529, %v1721
        %1723 = vmatprep.mubr.f32.mxu0 0.0
        %v1724 = vand.u32 %v363, 4294901760
        %1725 = vmatmul.mubr.f32.gmra.mrb[0].mxu0 %v1724
        %v1726 = vpop.f32.mrb[0].mxu0
        %v1727 = vadd.f32 %v1534, %v1726
        %v1728 = vpop.f32.mrb[0].mxu0
        %v1729 = vadd.f32 %v1536, %v1728
        %1730 = vmatprep.mubr.f32.mxu0 0.0
        %v1731 = vand.u32 %v366, 4294901760
        %1732 = vmatmul.mubr.f32.gmra.mrb[0].mxu0 %v1731
        %v1733 = vpop.f32.mrb[0].mxu0
        %v1734 = vadd.f32 %v1541, %v1733
        %v1735 = vpop.f32.mrb[0].mxu0
        %v1736 = vadd.f32 %v1543, %v1735
        %1737 = vmatprep.mubr.f32.mxu0 0.0
        %v1738 = vand.u32 %v369, 4294901760
        %1739 = vmatmul.mubr.f32.gmra.mrb[0].mxu0 %v1738
        %v1740 = vpop.f32.mrb[0].mxu0
        %v1741 = vadd.f32 %v1548, %v1740
        %v1742 = vpop.f32.mrb[0].mxu0
        %v1743 = vadd.f32 %v1550, %v1742
        %1744 = vmatprep.mubr.f32.mxu0 0.0
        %v1745 = vand.u32 %v372, 4294901760
        %1746 = vmatmul.mubr.f32.gmra.mrb[0].mxu0 %v1745
        %v1747 = vpop.f32.mrb[0].mxu0
        %v1748 = vadd.f32 %v1555, %v1747
        %v1749 = vpop.f32.mrb[0].mxu0
        %v1750 = vadd.f32 %v1557, %v1749
        %1751 = vmatprep.mubr.f32.mxu0 0.0
        %v1752 = vand.u32 %v375, 4294901760
        %1753 = vmatmul.mubr.f32.gmra.mrb[0].mxu0 %v1752
        %v1754 = vpop.f32.mrb[0].mxu0
        %v1755 = vadd.f32 %v1562, %v1754
        %v1756 = vpop.f32.mrb[0].mxu0
        %v1757 = vadd.f32 %v1564, %v1756
        %1758 = vdwg.mxu0
        %1759 = vst [vmem:[%s188] sm:$0xff] %v1650
        %1760 = vst [vmem:[%s188 + $0x8] sm:$0xff] %v1652
        %1761 = vst [vmem:[%s188 + $0x10] sm:$0xff] %v1657
        %1762 = vst [vmem:[%s188 + $0x18] sm:$0xff] %v1659
        %1763 = vst [vmem:[%s188 + $0x20] sm:$0xff] %v1664
        %1764 = vst [vmem:[%s188 + $0x28] sm:$0xff] %v1666
        %1765 = vst [vmem:[%s188 + $0x30] sm:$0xff] %v1671
        %1766 = vst [vmem:[%s188 + $0x38] sm:$0xff] %v1673
        %1767 = vst [vmem:[%s188 + $0x40] sm:$0xff] %v1678
        %1768 = vst [vmem:[%s188 + $0x48] sm:$0xff] %v1680
        %1769 = vst [vmem:[%s188 + $0x50] sm:$0xff] %v1685
        %1770 = vst [vmem:[%s188 + $0x58] sm:$0xff] %v1687
        %1771 = vst [vmem:[%s188 + $0x60] sm:$0xff] %v1692
        %1772 = vst [vmem:[%s188 + $0x68] sm:$0xff] %v1694
        %1773 = vst [vmem:[%s188 + $0x70] sm:$0xff] %v1699
        %1774 = vst [vmem:[%s188 + $0x78] sm:$0xff] %v1701
        %1775 = vst [vmem:[%s188 + $0x80] sm:$0xff] %v1706
        %1776 = vst [vmem:[%s188 + $0x88] sm:$0xff] %v1708
        %1777 = vst [vmem:[%s188 + $0x90] sm:$0xff] %v1713
        %1778 = vst [vmem:[%s188 + $0x98] sm:$0xff] %v1715
        %1779 = vst [vmem:[%s188 + $0xa0] sm:$0xff] %v1720
        %1780 = vst [vmem:[%s188 + $0xa8] sm:$0xff] %v1722
        %1781 = vst [vmem:[%s188 + $0xb0] sm:$0xff] %v1727
        %1782 = vst [vmem:[%s188 + $0xb8] sm:$0xff] %v1729
        %1783 = vst [vmem:[%s188 + $0xc0] sm:$0xff] %v1734
        %1784 = vst [vmem:[%s188 + $0xc8] sm:$0xff] %v1736
        %1785 = vst [vmem:[%s188 + $0xd0] sm:$0xff] %v1741
        %1786 = vst [vmem:[%s188 + $0xd8] sm:$0xff] %v1743
        %1787 = vst [vmem:[%s188 + $0xe0] sm:$0xff] %v1748
        %1788 = vst [vmem:[%s188 + $0xe8] sm:$0xff] %v1750
        %1789 = vst [vmem:[%s188 + $0xf0] sm:$0xff] %v1755
        %1790 = vst [vmem:[%s188 + $0xf8] sm:$0xff] %v1757
        %s1791 = sand.u32 %s109, 1
        %s1792 = scalar_lea.sflag [#allocation3], %s1791
        %s1793 = sand.u32 %s109, 1
        %s1794 = smul.addr %s1793, 256
        %s1795 = scalar_lea.vmem [#allocation2], %s1794
        // Predicated region
        $region33: #{tpu_custom_call.1} parent=31 // pred_check
          %p1796 = pneg %p119
        $region34: #{tpu_custom_call.1} parent=31 // pred_check_branch
          %1798 = sbr.rel (%p1796) target = $region36
        $region35: #{tpu_custom_call.1} parent=31 // pred_region
          %s1799 = smul.u32 2, %s22
          %s1801 = ssub.s32 4096, 4096
          %1802 = vsyncadd %s1792, %s1801
          %s1803 = smul.addr %s21, 32
          %s1804 = sadd.s32 %s1799, %s1803
          %s1805 = smul.addr %s1804, 128
          %s1806 = scalar_lea.hbm %s3, %s1805
          %s1807 = sshll.u32 %s1795, 4
          %s1808 = int_to_ptr.vmem [resolvable:$true] %s1807
          %1813 = dma.vmem_to_hbm [thread:$0]  %s1808, 4096, %s1806, %s1792, 256, 256, 16
        $region36: #{tpu_custom_call.1} parent=31 // pred_fallthru
          _
      $region32: #{tpu_custom_call.1} parent=5 // pred_fallthru
        _
      %p1814 = scmp.le.s32.totalorder 2, %s12
      // Predicated region
      $region37: #{tpu_custom_call.1} parent=5 // pred_check
        %p1815 = pneg %p1814
      $region38: #{tpu_custom_call.1} parent=5 // pred_check_branch
        %1817 = sbr.rel (%p1815) target = $region40
      $region39: #{tpu_custom_call.1} parent=5 // pred_region
        %s1818 = ssub.s32 %s12, 2
        // Predicated region
        $region41: #{tpu_custom_call.1} parent=39 // pred_check
          %p1819 = pneg %p125
        $region42: #{tpu_custom_call.1} parent=39 // pred_check_branch
          %1821 = sbr.rel (%p1819) target = $region44
        $region43: #{tpu_custom_call.1} parent=39 // pred_region
          %s1822 = sand.u32 %s110, 1
          %s1823 = scalar_lea.sflag [#allocation3], %s1822
          %s1824 = sand.u32 %s110, 1
          %s1825 = smul.addr %s1824, 256
          %s1826 = scalar_lea.vmem [#allocation2], %s1825
          %1827 = dma.done %s1823, 4096
        $region44: #{tpu_custom_call.1} parent=39 // pred_fallthru
          _
      $region40: #{tpu_custom_call.1} parent=5 // pred_fallthru
        _
    $region6: #{tpu_custom_call.1} parent=1 // loop_footer
      %s16 = sadd.s32 1, %s12
    $region7: #{tpu_custom_call.1} parent=1 // loop_footer_branch
      %11 = sbr.rel target = $region3
    $region8: #{tpu_custom_call.1} parent=1 // loop_exit
      _
    %1828 = vsyncpa [#allocation3], 1
    %s1829 = scalar_lea.sflag [#allocation3], 1
    %1830 = vsyncpa %s1829, 1

</llo_original>
